<compile_context>
chip_gen: v7x
topology: tpu7x:2x2x1
jax: 0.10.0
libtpu: 0.0.40
codegen_flags: <defaults>
</compile_context>

<pallas_src>
import math
import jax
import jax.numpy as jnp
import numpy as np
from jax.experimental import pallas as pl
from jax.experimental.pallas import tpu as pltpu

# ---- static hyper-parameters (mirror PNATower.__init__) ----
IN_DIM    = 8                        # in_dim
H_DIM     = 2 * IN_DIM               # node 'h' width (PNA-LSPE feeds h||p)
OUT_DIM   = 16                       # out_dim
EDGE_DIM  = 8                        # edge_dim (edge_features=True)
K         = 4                        # in-degree of every node (D in reduce_func)
N         = 32                       # number of nodes
N_AGG     = 4                        # mean, max, min, std
N_SCAL    = 3                        # identity, amplification, attenuation
AVG_D_LOG = math.log(3.0 + 1.0)      # avg_d['log']
AMP       = math.log(K + 1.0) / AVG_D_LOG   # amplification scaler (D = K, constant)
ATT       = AVG_D_LOG / math.log(K + 1.0)   # attenuation scaler
EPS       = 1e-5

CAT_H  = (N_AGG * N_SCAL + 2) * IN_DIM       # 112 : posttrans_h input width (torch layout)
CAT_P  = (N_AGG * N_SCAL + 1) * IN_DIM       # 104 : posttrans_p input width (torch layout)
PRE_W  = 2 * IN_DIM                          # 16  : fused pretrans output  [e_h | e_p]
POST_W = 2 * OUT_DIM                         # 32  : fused posttrans output [h_o | p_o]
EDGE_IN = 2 * H_DIM + 2 * IN_DIM + EDGE_DIM  # 56  : packed edge-input width
HP_W    = H_DIM + IN_DIM                     # 24  : packed node-input width [h | p]


def pna_tower_kernel(edge_ref, hp_ref, sn_ref, wn_ref, ww_ref, bb_ref, out_ref):
    f32 = jnp.float32

    # ---- fused pretrans MLPs over all K*N edges (one matmul per layer) ----
    x_e = edge_ref[...]                                   # (K*N, 56)
    w1e = wn_ref[0:EDGE_IN, :]                            # (56, 16)
    w2e = wn_ref[EDGE_IN:EDGE_IN + PRE_W, :]              # (16, 16) block-diag [w2ph|0;0|w2pp]
    b1e = bb_ref[0:1, 0:PRE_W]                            # (1, 16)
    b2e = bb_ref[1:2, 0:PRE_W]

    z = jnp.dot(x_e, w1e, preferred_element_type=f32) + b1e          # (K*N, 16)
    lane_e = jax.lax.broadcasted_iota(jnp.int32, z.shape, 1)
    z = jnp.where(lane_e < IN_DIM, jnp.maximum(z, 0.0), jnp.tanh(z)) # relu | tanh halves
    e = jnp.dot(z, w2e, preferred_element_type=f32) + b2e            # (K*N, 16) = [e_h|e_p]

    # ---- PNA aggregation over the K neighbours (contiguous N-row slabs, VPU only) ----
    e0 = e[0:N, :]
    s = e0
    ssq = e0 * e0
    mx = e0
    mn = e0
    for k in range(1, K):                                 # static unroll, K = 4
        ek = e[k * N:(k + 1) * N, :]
        s = s + ek
        ssq = ssq + ek * ek
        mx = jnp.maximum(mx, ek)
        mn = jnp.minimum(mn, ek)
    inv_k = 1.0 / K
    mean = s * inv_k
    std = jnp.sqrt(jnp.maximum(ssq * inv_k - mean * mean, 0.0) + EPS)

    # ---- fused posttrans MLPs: scalers folded into weights; the torch.cat is realised
    #      by splitting the layer-1 weight rows and summing partial dots (no scratch) ----
    hp = hp_ref[...]                                      # (N, 24) = [h | p]
    w1_node = ww_ref[0:24, :]                             # (24, 32)
    w1_mean = ww_ref[24:40, :]                            # (16, 32) each, scalers folded
    w1_max  = ww_ref[40:56, :]
    w1_min  = ww_ref[56:72, :]
    w1_std  = ww_ref[72:88, :]
    w2t     = ww_ref[88:120, :]                           # (32, 32) block-diag
    b1t = bb_ref[2:3, :]                                  # (1, 32)
    b2t = bb_ref[3:4, :]

    zt = (jnp.dot(hp,   w1_node, preferred_element_type=f32)
          + jnp.dot(mean, w1_mean, preferred_element_type=f32)
          + jnp.dot(mx,   w1_max,  preferred_element_type=f32)
          + jnp.dot(mn,   w1_min,  preferred_element_type=f32)
          + jnp.dot(std,  w1_std,  preferred_element_type=f32)
          + b1t)                                          # (N, 32)
    lane_t = jax.lax.broadcasted_iota(jnp.int32, zt.shape, 1)
    zt = jnp.where(lane_t < OUT_DIM, jnp.maximum(zt, 0.0), jnp.tanh(zt))
    out = jnp.dot(zt, w2t, preferred_element_type=f32) + b2t         # (N, 32) = [h_o|p_o]

    # ---- graph_norm (h half only) + folded eval-mode BatchNorm1d; dropout = identity ----
    # TODO(synk): training-mode batch statistics / dropout RNG not implemented (eval semantics).
    sn = sn_ref[...]                                      # (N, 1)
    sn_full = jnp.where(lane_t < OUT_DIM, sn, 1.0)        # snorm on h lanes, 1 on p lanes
    out = out * sn_full * bb_ref[4:5, :] + bb_ref[5:6, :] # BN scale/shift (identity on p)
    out_ref[...] = out


def init_params(key):
    ks = jax.random.split(key, 8)

    def lin(k, fin, fout):
        kw, kb = jax.random.split(k)
        w = jax.random.normal(kw, (fin, fout), jnp.float32) * (1.0 / math.sqrt(fin))
        b = jax.random.normal(kb, (1, fout), jnp.float32) * 0.1
        return w, b

    params = {
        'pre_h': (lin(ks[0], 2 * H_DIM + EDGE_DIM, IN_DIM), lin(ks[1], IN_DIM, IN_DIM)),
        'pre_p': (lin(ks[2], 2 * IN_DIM + EDGE_DIM, IN_DIM), lin(ks[3], IN_DIM, IN_DIM)),
        'post_h': (lin(ks[4], CAT_H, OUT_DIM), lin(ks[5], OUT_DIM, OUT_DIM)),
        'post_p': (lin(ks[6], CAT_P, OUT_DIM), lin(ks[7], OUT_DIM, OUT_DIM)),
    }
    # BatchNorm1d(out_dim) default init, eval mode: gamma=1, beta=0, mean=0, var=1
    gamma = jnp.ones((1, OUT_DIM), jnp.float32)
    beta = jnp.zeros((1, OUT_DIM), jnp.float32)
    rmean = jnp.zeros((1, OUT_DIM), jnp.float32)
    rvar = jnp.ones((1, OUT_DIM), jnp.float32)
    bn_scale = gamma / jnp.sqrt(rvar + 1e-5)
    bn_shift = beta - rmean * bn_scale
    params['bn'] = (bn_scale, bn_shift)
    return params


def _pack_params(params):
    """Fold the constant scalers + fuse h/p paths and pack everything into 3 arrays."""
    (w1ph, b1ph), (w2ph, b2ph) = params['pre_h']
    (w1pp, b1pp), (w2pp, b2pp) = params['pre_p']
    (w1th, b1th), (w2th, b2th) = params['post_h']
    (w1tp, b1tp), (w2tp, b2tp) = params['post_p']
    bns, bnb = params['bn']
    z = lambda r, c: jnp.zeros((r, c), jnp.float32)

    # fused pretrans layer-1: input [h_src|h_dst|p_src|p_dst|ef] (56) -> [zh|zp] (16)
    w1e = jnp.concatenate([
        jnp.concatenate([w1ph[0:H_DIM],            z(H_DIM, IN_DIM)], axis=1),
        jnp.concatenate([w1ph[H_DIM:2 * H_DIM],    z(H_DIM, IN_DIM)], axis=1),
        jnp.concatenate([z(IN_DIM, IN_DIM),        w1pp[0:IN_DIM]], axis=1),
        jnp.concatenate([z(IN_DIM, IN_DIM),        w1pp[IN_DIM:2 * IN_DIM]], axis=1),
        jnp.concatenate([w1ph[2 * H_DIM:],         w1pp[2 * IN_DIM:]], axis=1),
    ], axis=0)                                                    # (56, 16)
    w2e = jnp.block([[w2ph, z(IN_DIM, IN_DIM)], [z(IN_DIM, IN_DIM), w2pp]])   # (16, 16)
    wn = jnp.concatenate([w1e, w2e], axis=0)                      # (72, 16)

    # fused posttrans layer-1 with scalers folded
    # (valid only because the graph is K-regular => D is a compile-time constant)
    def fold(w, base, blk):
        return (w[base:base + IN_DIM]
                + AMP * w[base + blk:base + blk + IN_DIM]
                + ATT * w[base + 2 * blk:base + 2 * blk + IN_DIM])

    w_node = jnp.concatenate([
        jnp.concatenate([w1th[0:H_DIM],      z(H_DIM, OUT_DIM)], axis=1),
        jnp.concatenate([z(IN_DIM, OUT_DIM), w1tp[0:IN_DIM]], axis=1),
    ], axis=0)                                                    # (24, 32)
    agg_blocks = []
    for j in range(N_AGG):
        fh = fold(w1th, H_DIM + IN_DIM * j, N_AGG * IN_DIM)       # (8, 16)
        fp = fold(w1tp, IN_DIM + IN_DIM * j, N_AGG * IN_DIM)      # (8, 16)
        agg_blocks.append(jnp.concatenate([
            jnp.concatenate([fh, z(IN_DIM, OUT_DIM)], axis=1),
            jnp.concatenate([z(IN_DIM, OUT_DIM), fp], axis=1)], axis=0))      # (16, 32)
    w1t = jnp.concatenate([w_node] + agg_blocks, axis=0)          # (88, 32)
    w2t = jnp.block([[w2th, z(OUT_DIM, OUT_DIM)], [z(OUT_DIM, OUT_DIM), w2tp]])  # (32, 32)
    ww = jnp.concatenate([w1t, w2t], axis=0)                      # (120, 32)

    pad = POST_W - PRE_W
    bb = jnp.concatenate([
        jnp.concatenate([b1ph, b1pp, z(1, pad)], axis=1),         # b1e (padded to 32)
        jnp.concatenate([b2ph, b2pp, z(1, pad)], axis=1),         # b2e
        jnp.concatenate([b1th, b1tp], axis=1),                    # b1t
        jnp.concatenate([b2th, b2tp], axis=1),                    # b2t
        jnp.concatenate([bns, jnp.ones((1, OUT_DIM), jnp.float32)], axis=1),   # BN scale
        jnp.concatenate([bnb, jnp.zeros((1, OUT_DIM), jnp.float32)], axis=1),  # BN shift
    ], axis=0)                                                    # (6, 32)
    return wn, ww, bb


@jax.jit
def pna_tower_forward(h, p, h_src, p_src, ef, snorm, params):
    wn, ww, bb = _pack_params(params)

    # pack edge-level pretrans inputs, neighbour-major so each of the K slabs of the
    # flattened (K*N, 56) array holds one neighbour for every node (contiguous rows).
    h_dst = jnp.broadcast_to(h[:, None, :], h_src.shape)
    p_dst = jnp.broadcast_to(p[:, None, :], p_src.shape)
    edge_in = jnp.concatenate([h_src, h_dst, p_src, p_dst, ef], axis=-1)   # (N, K, 56)
    edge_in = jnp.transpose(edge_in, (1, 0, 2)).reshape(K * N, EDGE_IN)    # (K*N, 56)
    hp = jnp.concatenate([h, p], axis=-1)                                  # (N, 24)

    full = lambda arr: pl.BlockSpec(arr.shape, lambda i: (0,) * arr.ndim)

    out = pl.pallas_call(
        pna_tower_kernel,
        out_shape=jax.ShapeDtypeStruct((N, POST_W), jnp.float32),
        grid_spec=pltpu.PrefetchScalarGridSpec(
            num_scalar_prefetch=0,
            grid=(1,),                                   # whole problem in one step
            in_specs=[full(edge_in), full(hp), full(snorm), full(wn), full(ww), full(bb)],
            out_specs=pl.BlockSpec((N, POST_W), lambda i: (0, 0)),
        ),
        compiler_params=pltpu.CompilerParams(dimension_semantics=("arbitrary",)),
    )(edge_in, hp, snorm, wn, ww, bb)
    return out[:, :OUT_DIM], out[:, OUT_DIM:]


def reference_forward(h, p, h_src, p_src, ef, snorm, params):
    (w1ph, b1ph), (w2ph, b2ph) = params['pre_h']
    (w1pp, b1pp), (w2pp, b2pp) = params['pre_p']
    (w1th, b1th), (w2th, b2th) = params['post_h']
    (w1tp, b1tp), (w2tp, b2tp) = params['post_p']
    bns, bnb = params['bn']

    h_dst_b = jnp.broadcast_to(h[:, None, :], h_src.shape)
    p_dst_b = jnp.broadcast_to(p[:, None, :], p_src.shape)
    z_h = jnp.concatenate([h_src, h_dst_b, ef], axis=-1)
    e_h = jnp.maximum(z_h @ w1ph + b1ph, 0.0) @ w2ph + b2ph
    z_p = jnp.concatenate([p_src, p_dst_b, ef], axis=-1)
    e_p = jnp.tanh(z_p @ w1pp + b1pp) @ w2pp + b2pp

    def agg(e):
        mean = e.mean(axis=1)
        mx = e.max(axis=1)
        mn = e.min(axis=1)
        var = jnp.maximum((e * e).mean(axis=1) - mean * mean, 0.0)
        std = jnp.sqrt(var + EPS)
        a = jnp.concatenate([mean, mx, mn, std], axis=-1)
        return jnp.concatenate([a, a * AMP, a * ATT], axis=-1)

    h_cat = jnp.concatenate([h, agg(e_h)], axis=-1)
    p_cat = jnp.concatenate([p, agg(e_p)], axis=-1)
    h_o = jnp.maximum(h_cat @ w1th + b1th, 0.0) @ w2th + b2th
    p_o = jnp.tanh(p_cat @ w1tp + b1tp) @ w2tp + b2tp
    h_o = h_o * snorm
    h_o = h_o * bns + bnb
    return h_o, p_o


if __name__ == "__main__":
    key = jax.random.PRNGKey(0)
    k_h, k_p, k_ef, k_sn, k_nbr, k_par = jax.random.split(key, 6)
    h = jax.random.normal(k_h, (N, H_DIM), jnp.float32)
    p = jax.random.normal(k_p, (N, IN_DIM), jnp.float32)
    ef = jax.random.normal(k_ef, (N, K, EDGE_DIM), jnp.float32)
    snorm = jax.random.uniform(k_sn, (N, 1), jnp.float32, 0.5, 1.5)
    nbr = jax.random.randint(k_nbr, (N, K), 0, N)  # K-regular graph: K in-neighbours/node
    params = init_params(k_par)

    # neighbour gather (plain-JAX glue; equivalent to DGL's edge src lookup)
    h_src = h[nbr]  # (N, K, H_DIM)
    p_src = p[nbr]  # (N, K, IN_DIM)

    h_out, p_out = pna_tower_forward(h, p, h_src, p_src, ef, snorm, params)
    jax.block_until_ready((h_out, p_out))

    h_exp, p_exp = reference_forward(h, p, h_src, p_src, ef, snorm, params)
    np.testing.assert_allclose(np.asarray(h_out), np.asarray(h_exp), rtol=2e-3, atol=2e-3)
    np.testing.assert_allclose(np.asarray(p_out), np.asarray(p_exp), rtol=2e-3, atol=2e-3)
    print("KERNEL_OK")
</pallas_src>

<mosaic_0001>
module attributes {stable_mosaic.version = 11 : i64} {
  func.func @pna_tower_kernel(%arg0: i32, %arg1: memref<128x56xf32, #tpu.memory_space<vmem>>, %arg2: memref<32x24xf32, #tpu.memory_space<vmem>>, %arg3: memref<32x1xf32, #tpu.memory_space<vmem>>, %arg4: memref<72x16xf32, #tpu.memory_space<vmem>>, %arg5: memref<120x32xf32, #tpu.memory_space<vmem>>, %arg6: memref<6x32xf32, #tpu.memory_space<vmem>>, %arg7: memref<32x32xf32, #tpu.memory_space<vmem>>) attributes {dimension_semantics = [#tpu.dimension_semantics<arbitrary>], iteration_bounds = array<i64: 1>, scalar_prefetch = 0 : i64, scratch_operands = 0 : i64, tpu.core_type = #tpu.core_type<tc>, window_params = [{pipeline_mode = #tpu.pipeline_mode<synchronous>, transform_indices = @transform_0, window_bounds = array<i64: 128, 56>}, {pipeline_mode = #tpu.pipeline_mode<synchronous>, transform_indices = @transform_1, window_bounds = array<i64: 32, 24>}, {pipeline_mode = #tpu.pipeline_mode<synchronous>, transform_indices = @transform_2, window_bounds = array<i64: 32, 1>}, {pipeline_mode = #tpu.pipeline_mode<synchronous>, transform_indices = @transform_3, window_bounds = array<i64: 72, 16>}, {pipeline_mode = #tpu.pipeline_mode<synchronous>, transform_indices = @transform_4, window_bounds = array<i64: 120, 32>}, {pipeline_mode = #tpu.pipeline_mode<synchronous>, transform_indices = @transform_5, window_bounds = array<i64: 6, 32>}, {pipeline_mode = #tpu.pipeline_mode<synchronous>, transform_indices = @transform_6, window_bounds = array<i64: 32, 32>}]} {
    %c0 = arith.constant 0 : index
    %c0_0 = arith.constant 0 : index
    %0 = vector.load %arg1[%c0, %c0_0] : memref<128x56xf32, #tpu.memory_space<vmem>>, vector<128x56xf32>
    %c0_1 = arith.constant 0 : index
    %c0_2 = arith.constant 0 : index
    %1 = vector.load %arg4[%c0_1, %c0_2] : memref<72x16xf32, #tpu.memory_space<vmem>>, vector<56x16xf32>
    %c56 = arith.constant 56 : index
    %c0_3 = arith.constant 0 : index
    %2 = vector.load %arg4[%c56, %c0_3] : memref<72x16xf32, #tpu.memory_space<vmem>>, vector<16x16xf32>
    %c0_4 = arith.constant 0 : index
    %c0_5 = arith.constant 0 : index
    %3 = vector.load %arg6[%c0_4, %c0_5] : memref<6x32xf32, #tpu.memory_space<vmem>>, vector<1x16xf32>
    %c1 = arith.constant 1 : index
    %c0_6 = arith.constant 0 : index
    %4 = vector.load %arg6[%c1, %c0_6] : memref<6x32xf32, #tpu.memory_space<vmem>>, vector<1x16xf32>
    %cst = arith.constant dense<0.000000e+00> : vector<128x16xf32>
    %5 = tpu.matmul %0, %1, %cst {dimension_numbers = #tpu.dot_dimension_numbers<[1], [0], [0], [1], [0, 0, 1, 1], [], []>} : vector<128x56xf32>, vector<56x16xf32>, vector<128x16xf32> -> vector<128x16xf32>
    %6 = vector.broadcast %3 : vector<1x16xf32> to vector<128x16xf32>
    %7 = arith.addf %5, %6 : vector<128x16xf32>
    %8 = tpu.iota {dimensions = array<i32: 1>} : vector<128x16xi32>
    %c8_i32 = arith.constant 8 : i32
    %9 = vector.broadcast %c8_i32 : i32 to vector<128x16xi32>
    %10 = arith.cmpi slt, %8, %9 : vector<128x16xi32>
    %cst_7 = arith.constant 0.000000e+00 : f32
    %11 = vector.broadcast %cst_7 : f32 to vector<128x16xf32>
    %12 = arith.maximumf %7, %11 : vector<128x16xf32>
    %13 = math.tanh %7 : vector<128x16xf32>
    %14 = arith.select %10, %12, %13 : vector<128x16xi1>, vector<128x16xf32>
    %cst_8 = arith.constant dense<0.000000e+00> : vector<128x16xf32>
    %15 = tpu.matmul %14, %2, %cst_8 {dimension_numbers = #tpu.dot_dimension_numbers<[1], [0], [0], [1], [0, 0, 1, 1], [], []>} : vector<128x16xf32>, vector<16x16xf32>, vector<128x16xf32> -> vector<128x16xf32>
    %16 = vector.broadcast %4 : vector<1x16xf32> to vector<128x16xf32>
    %17 = arith.addf %15, %16 : vector<128x16xf32>
    %18 = vector.extract_strided_slice %17 {offsets = [0, 0], sizes = [32, 16], strides = [1, 1]} : vector<128x16xf32> to vector<32x16xf32>
    %19 = arith.mulf %18, %18 : vector<32x16xf32>
    %20 = vector.extract_strided_slice %17 {offsets = [32, 0], sizes = [32, 16], strides = [1, 1]} : vector<128x16xf32> to vector<32x16xf32>
    %21 = arith.addf %18, %20 : vector<32x16xf32>
    %22 = arith.mulf %20, %20 : vector<32x16xf32>
    %23 = arith.addf %19, %22 : vector<32x16xf32>
    %24 = arith.maximumf %18, %20 : vector<32x16xf32>
    %25 = arith.minimumf %18, %20 : vector<32x16xf32>
    %26 = vector.extract_strided_slice %17 {offsets = [64, 0], sizes = [32, 16], strides = [1, 1]} : vector<128x16xf32> to vector<32x16xf32>
    %27 = arith.addf %21, %26 : vector<32x16xf32>
    %28 = arith.mulf %26, %26 : vector<32x16xf32>
    %29 = arith.addf %23, %28 : vector<32x16xf32>
    %30 = arith.maximumf %24, %26 : vector<32x16xf32>
    %31 = arith.minimumf %25, %26 : vector<32x16xf32>
    %32 = vector.extract_strided_slice %17 {offsets = [96, 0], sizes = [32, 16], strides = [1, 1]} : vector<128x16xf32> to vector<32x16xf32>
    %33 = arith.addf %27, %32 : vector<32x16xf32>
    %34 = arith.mulf %32, %32 : vector<32x16xf32>
    %35 = arith.addf %29, %34 : vector<32x16xf32>
    %36 = arith.maximumf %30, %32 : vector<32x16xf32>
    %37 = arith.minimumf %31, %32 : vector<32x16xf32>
    %cst_9 = arith.constant 2.500000e-01 : f32
    %38 = vector.broadcast %cst_9 : f32 to vector<32x16xf32>
    %39 = arith.mulf %33, %38 : vector<32x16xf32>
    %cst_10 = arith.constant 2.500000e-01 : f32
    %40 = vector.broadcast %cst_10 : f32 to vector<32x16xf32>
    %41 = arith.mulf %35, %40 : vector<32x16xf32>
    %42 = arith.mulf %39, %39 : vector<32x16xf32>
    %43 = arith.subf %41, %42 : vector<32x16xf32>
    %cst_11 = arith.constant 0.000000e+00 : f32
    %44 = vector.broadcast %cst_11 : f32 to vector<32x16xf32>
    %45 = arith.maximumf %43, %44 : vector<32x16xf32>
    %cst_12 = arith.constant 9.99999974E-6 : f32
    %46 = vector.broadcast %cst_12 : f32 to vector<32x16xf32>
    %47 = arith.addf %45, %46 : vector<32x16xf32>
    %48 = math.sqrt %47 : vector<32x16xf32>
    %c0_13 = arith.constant 0 : index
    %c0_14 = arith.constant 0 : index
    %49 = vector.load %arg2[%c0_13, %c0_14] : memref<32x24xf32, #tpu.memory_space<vmem>>, vector<32x24xf32>
    %c0_15 = arith.constant 0 : index
    %c0_16 = arith.constant 0 : index
    %50 = vector.load %arg5[%c0_15, %c0_16] : memref<120x32xf32, #tpu.memory_space<vmem>>, vector<24x32xf32>
    %c24 = arith.constant 24 : index
    %c0_17 = arith.constant 0 : index
    %51 = vector.load %arg5[%c24, %c0_17] : memref<120x32xf32, #tpu.memory_space<vmem>>, vector<16x32xf32>
    %c40 = arith.constant 40 : index
    %c0_18 = arith.constant 0 : index
    %52 = vector.load %arg5[%c40, %c0_18] : memref<120x32xf32, #tpu.memory_space<vmem>>, vector<16x32xf32>
    %c56_19 = arith.constant 56 : index
    %c0_20 = arith.constant 0 : index
    %53 = vector.load %arg5[%c56_19, %c0_20] : memref<120x32xf32, #tpu.memory_space<vmem>>, vector<16x32xf32>
    %c72 = arith.constant 72 : index
    %c0_21 = arith.constant 0 : index
    %54 = vector.load %arg5[%c72, %c0_21] : memref<120x32xf32, #tpu.memory_space<vmem>>, vector<16x32xf32>
    %c88 = arith.constant 88 : index
    %c0_22 = arith.constant 0 : index
    %55 = vector.load %arg5[%c88, %c0_22] : memref<120x32xf32, #tpu.memory_space<vmem>>, vector<32x32xf32>
    %c2 = arith.constant 2 : index
    %c0_23 = arith.constant 0 : index
    %56 = vector.load %arg6[%c2, %c0_23] : memref<6x32xf32, #tpu.memory_space<vmem>>, vector<1x32xf32>
    %c3 = arith.constant 3 : index
    %c0_24 = arith.constant 0 : index
    %57 = vector.load %arg6[%c3, %c0_24] : memref<6x32xf32, #tpu.memory_space<vmem>>, vector<1x32xf32>
    %cst_25 = arith.constant dense<0.000000e+00> : vector<32x32xf32>
    %58 = tpu.matmul %49, %50, %cst_25 {dimension_numbers = #tpu.dot_dimension_numbers<[1], [0], [0], [1], [0, 0, 1, 1], [], []>} : vector<32x24xf32>, vector<24x32xf32>, vector<32x32xf32> -> vector<32x32xf32>
    %cst_26 = arith.constant dense<0.000000e+00> : vector<32x32xf32>
    %59 = tpu.matmul %39, %51, %cst_26 {dimension_numbers = #tpu.dot_dimension_numbers<[1], [0], [0], [1], [0, 0, 1, 1], [], []>} : vector<32x16xf32>, vector<16x32xf32>, vector<32x32xf32> -> vector<32x32xf32>
    %60 = arith.addf %58, %59 : vector<32x32xf32>
    %cst_27 = arith.constant dense<0.000000e+00> : vector<32x32xf32>
    %61 = tpu.matmul %36, %52, %cst_27 {dimension_numbers = #tpu.dot_dimension_numbers<[1], [0], [0], [1], [0, 0, 1, 1], [], []>} : vector<32x16xf32>, vector<16x32xf32>, vector<32x32xf32> -> vector<32x32xf32>
    %62 = arith.addf %60, %61 : vector<32x32xf32>
    %cst_28 = arith.constant dense<0.000000e+00> : vector<32x32xf32>
    %63 = tpu.matmul %37, %53, %cst_28 {dimension_numbers = #tpu.dot_dimension_numbers<[1], [0], [0], [1], [0, 0, 1, 1], [], []>} : vector<32x16xf32>, vector<16x32xf32>, vector<32x32xf32> -> vector<32x32xf32>
    %64 = arith.addf %62, %63 : vector<32x32xf32>
    %cst_29 = arith.constant dense<0.000000e+00> : vector<32x32xf32>
    %65 = tpu.matmul %48, %54, %cst_29 {dimension_numbers = #tpu.dot_dimension_numbers<[1], [0], [0], [1], [0, 0, 1, 1], [], []>} : vector<32x16xf32>, vector<16x32xf32>, vector<32x32xf32> -> vector<32x32xf32>
    %66 = arith.addf %64, %65 : vector<32x32xf32>
    %67 = vector.broadcast %56 : vector<1x32xf32> to vector<32x32xf32>
    %68 = arith.addf %66, %67 : vector<32x32xf32>
    %69 = tpu.iota {dimensions = array<i32: 1>} : vector<32x32xi32>
    %c16_i32 = arith.constant 16 : i32
    %70 = vector.broadcast %c16_i32 : i32 to vector<32x32xi32>
    %71 = arith.cmpi slt, %69, %70 : vector<32x32xi32>
    %cst_30 = arith.constant 0.000000e+00 : f32
    %72 = vector.broadcast %cst_30 : f32 to vector<32x32xf32>
    %73 = arith.maximumf %68, %72 : vector<32x32xf32>
    %74 = math.tanh %68 : vector<32x32xf32>
    %75 = arith.select %71, %73, %74 : vector<32x32xi1>, vector<32x32xf32>
    %cst_31 = arith.constant dense<0.000000e+00> : vector<32x32xf32>
    %76 = tpu.matmul %75, %55, %cst_31 {dimension_numbers = #tpu.dot_dimension_numbers<[1], [0], [0], [1], [0, 0, 1, 1], [], []>} : vector<32x32xf32>, vector<32x32xf32>, vector<32x32xf32> -> vector<32x32xf32>
    %77 = vector.broadcast %57 : vector<1x32xf32> to vector<32x32xf32>
    %78 = arith.addf %76, %77 : vector<32x32xf32>
    %c0_32 = arith.constant 0 : index
    %c0_33 = arith.constant 0 : index
    %79 = vector.load %arg3[%c0_32, %c0_33] : memref<32x1xf32, #tpu.memory_space<vmem>>, vector<32x1xf32>
    %c16_i32_34 = arith.constant 16 : i32
    %80 = vector.broadcast %c16_i32_34 : i32 to vector<32x32xi32>
    %81 = arith.cmpi slt, %69, %80 : vector<32x32xi32>
    %cst_35 = arith.constant 1.000000e+00 : f32
    %82 = vector.shape_cast %79 : vector<32x1xf32> to vector<32x1xf32>
    %83 = vector.broadcast %82 : vector<32x1xf32> to vector<32x32xf32>
    %84 = vector.broadcast %cst_35 : f32 to vector<32x32xf32>
    %85 = arith.select %81, %83, %84 : vector<32x32xi1>, vector<32x32xf32>
    %86 = arith.mulf %78, %85 : vector<32x32xf32>
    %c4 = arith.constant 4 : index
    %c0_36 = arith.constant 0 : index
    %87 = vector.load %arg6[%c4, %c0_36] : memref<6x32xf32, #tpu.memory_space<vmem>>, vector<1x32xf32>
    %88 = vector.broadcast %87 : vector<1x32xf32> to vector<32x32xf32>
    %89 = arith.mulf %86, %88 : vector<32x32xf32>
    %c5 = arith.constant 5 : index
    %c0_37 = arith.constant 0 : index
    %90 = vector.load %arg6[%c5, %c0_37] : memref<6x32xf32, #tpu.memory_space<vmem>>, vector<1x32xf32>
    %91 = vector.broadcast %90 : vector<1x32xf32> to vector<32x32xf32>
    %92 = arith.addf %89, %91 : vector<32x32xf32>
    %c0_38 = arith.constant 0 : index
    %c0_39 = arith.constant 0 : index
    %93 = vector.load %arg7[%c0_38, %c0_39] : memref<32x32xf32, #tpu.memory_space<vmem>>, vector<32x32xf32>
    tpu.vector_store %arg7[%c0_38, %c0_39], %92 {strides = array<i32>} : memref<32x32xf32, #tpu.memory_space<vmem>>, vector<32x32xf32>,
    return
  }
  func.func @transform_0(%arg0: i32) -> (i32, i32) {
    %c0_i32 = arith.constant 0 : i32
    %c0_i32_0 = arith.constant 0 : i32
    %c0_i32_1 = arith.constant 0 : i32
    return %c0_i32, %c0_i32_0 : i32, i32
  }
  func.func @transform_1(%arg0: i32) -> (i32, i32) {
    %c0_i32 = arith.constant 0 : i32
    %c0_i32_0 = arith.constant 0 : i32
    %c0_i32_1 = arith.constant 0 : i32
    return %c0_i32, %c0_i32_0 : i32, i32
  }
  func.func @transform_2(%arg0: i32) -> (i32, i32) {
    %c0_i32 = arith.constant 0 : i32
    %c0_i32_0 = arith.constant 0 : i32
    %c0_i32_1 = arith.constant 0 : i32
    return %c0_i32, %c0_i32_0 : i32, i32
  }
  func.func @transform_3(%arg0: i32) -> (i32, i32) {
    %c0_i32 = arith.constant 0 : i32
    %c0_i32_0 = arith.constant 0 : i32
    %c0_i32_1 = arith.constant 0 : i32
    return %c0_i32, %c0_i32_0 : i32, i32
  }
  func.func @transform_4(%arg0: i32) -> (i32, i32) {
    %c0_i32 = arith.constant 0 : i32
    %c0_i32_0 = arith.constant 0 : i32
    %c0_i32_1 = arith.constant 0 : i32
    return %c0_i32, %c0_i32_0 : i32, i32
  }
  func.func @transform_5(%arg0: i32) -> (i32, i32) {
    %c0_i32 = arith.constant 0 : i32
    %c0_i32_0 = arith.constant 0 : i32
    %c0_i32_1 = arith.constant 0 : i32
    return %c0_i32, %c0_i32_0 : i32, i32
  }
  func.func @transform_6(%arg0: i32) -> (i32, i32) {
    %c0_i32 = arith.constant 0 : i32
    %c0_i32_0 = arith.constant 0 : i32
    %c0_i32_1 = arith.constant 0 : i32
    return %c0_i32, %c0_i32_0 : i32, i32
  }
}

</mosaic_0001>

<llo_original>
// kernel: pna_tower_forward.1
$region0: #{pna_tower_forward.1}
  #allocation0 [shape = 'u32[]', space=smem, size = 0x4, offset = 0x4, fixed_abs, tag = 'smem constant byte address 0x4 - core index']
  #allocation1 [shape = 'u32[144,128]{1,0:T(1,128)}', space=vmem, size = 0x12000, scoped, tag = 'internal scratch']
  %s0 = inlined_call_operand.vmem [shape: f32[128,56], index: 0, kind: input, shape index: {}]
  %s1 = inlined_call_operand.vmem [shape: f32[32,24], index: 1, kind: input, shape index: {}]
  %s2 = inlined_call_operand.vmem [shape: f32[32,1], index: 2, kind: input, shape index: {}]
  %s3 = inlined_call_operand.vmem [shape: f32[72,16], index: 3, kind: input, shape index: {}]
  %s4 = inlined_call_operand.vmem [shape: f32[120,32], index: 4, kind: input, shape index: {}]
  %s5 = inlined_call_operand.vmem [shape: f32[6,32], index: 5, kind: input, shape index: {}]
  %s6 = inlined_call_operand.vmem [shape: f32[32,32], index: 6, kind: output, shape index: {}]
  %s7 = sld [smem:[#allocation0]]
  $region34: #{pna_tower_forward.1} parent=0
    _
  %s9 = ssub.s32 1, %s7
  %s10 = scalar_select 0, %s9, %s7
  // Predicated region
  $region2: #{pna_tower_forward.1} parent=0 // pred_check
    _
  $region3: #{pna_tower_forward.1} parent=0 // pred_check_branch
    %12 = sbr.rel (0) target = $region5
  $region4: #{pna_tower_forward.1} parent=0 // pred_region
    _
  $region5: #{pna_tower_forward.1} parent=0 // pred_fallthru
    _
  // Predicated region
  $region6: #{pna_tower_forward.1} parent=0 // pred_check
    _
  $region7: #{pna_tower_forward.1} parent=0 // pred_check_branch
    %14 = sbr.rel (0) target = $region9
  $region8: #{pna_tower_forward.1} parent=0 // pred_region
    _
  $region9: #{pna_tower_forward.1} parent=0 // pred_fallthru
    _
  // Predicated region
  $region10: #{pna_tower_forward.1} parent=0 // pred_check
    _
  $region11: #{pna_tower_forward.1} parent=0 // pred_check_branch
    %16 = sbr.rel (0) target = $region13
  $region12: #{pna_tower_forward.1} parent=0 // pred_region
    _
  $region13: #{pna_tower_forward.1} parent=0 // pred_fallthru
    _
  // Predicated region
  $region14: #{pna_tower_forward.1} parent=0 // pred_check
    _
  $region15: #{pna_tower_forward.1} parent=0 // pred_check_branch
    %18 = sbr.rel (0) target = $region17
  $region16: #{pna_tower_forward.1} parent=0 // pred_region
    _
  $region17: #{pna_tower_forward.1} parent=0 // pred_fallthru
    _
  // Predicated region
  $region18: #{pna_tower_forward.1} parent=0 // pred_check
    _
  $region19: #{pna_tower_forward.1} parent=0 // pred_check_branch
    %20 = sbr.rel (0) target = $region21
  $region20: #{pna_tower_forward.1} parent=0 // pred_region
    _
  $region21: #{pna_tower_forward.1} parent=0 // pred_fallthru
    _
  // Predicated region
  $region22: #{pna_tower_forward.1} parent=0 // pred_check
    _
  $region23: #{pna_tower_forward.1} parent=0 // pred_check_branch
    %22 = sbr.rel (0) target = $region25
  $region24: #{pna_tower_forward.1} parent=0 // pred_region
    _
  $region25: #{pna_tower_forward.1} parent=0 // pred_fallthru
    _
  %v23 = vld [vmem:[%s0] sm:$0xff]
  %v24 = vld [vmem:[%s0 + $0x8] sm:$0xff]
  %v25 = vld [vmem:[%s0 + $0x10] sm:$0xff]
  %v26 = vld [vmem:[%s0 + $0x18] sm:$0xff]
  %v27 = vld [vmem:[%s0 + $0x20] sm:$0xff]
  %v28 = vld [vmem:[%s0 + $0x28] sm:$0xff]
  %v29 = vld [vmem:[%s0 + $0x30] sm:$0xff]
  %v30 = vld [vmem:[%s0 + $0x38] sm:$0xff]
  %v31 = vld [vmem:[%s0 + $0x40] sm:$0xff]
  %v32 = vld [vmem:[%s0 + $0x48] sm:$0xff]
  %v33 = vld [vmem:[%s0 + $0x50] sm:$0xff]
  %v34 = vld [vmem:[%s0 + $0x58] sm:$0xff]
  %v35 = vld [vmem:[%s0 + $0x60] sm:$0xff]
  %v36 = vld [vmem:[%s0 + $0x68] sm:$0xff]
  %v37 = vld [vmem:[%s0 + $0x70] sm:$0xff]
  %v38 = vld [vmem:[%s0 + $0x78] sm:$0xff]
  %v39 = vld [vmem:[%s3] sm:$0xff]
  %v40 = vld [vmem:[%s3 + $0x8] sm:$0xff]
  %v41 = vld [vmem:[%s3 + $0x10] sm:$0xff]
  %v42 = vld [vmem:[%s3 + $0x18] sm:$0xff]
  %v43 = vld [vmem:[%s3 + $0x20] sm:$0xff]
  %v44 = vld [vmem:[%s3 + $0x28] sm:$0xff]
  %v45 = vld [vmem:[%s3 + $0x30] sm:$0xff]
  %v46 = vld [vmem:[%s3 + $0x38] sm:$0xff]
  %v47 = vld [vmem:[%s3 + $0x40] sm:$0xff]
  %v48 = vld [vmem:[%s5] sm:$0x1]
  %v49 = vld [vmem:[%s5 + $0x1] sm:$0x1]
  %v50 = vlaneseq
  %v51 = vshrl.u32 %v50, 7
  %v52 = vsub.s32 0, %v51
  %v53 = vrot.slane %v48, %v52
  %vm54 = vcmask 457728
  %v56 = vsel %vm54, %v23, 0
  %v59 = vsel %vm54, %v24, 0
  %v62 = vsel %vm54, %v25, 0
  %v65 = vsel %vm54, %v26, 0
  %v68 = vsel %vm54, %v27, 0
  %v71 = vsel %vm54, %v28, 0
  %v74 = vsel %vm54, %v29, 0
  %v77 = vsel %vm54, %v30, 0
  %v80 = vsel %vm54, %v31, 0
  %v83 = vsel %vm54, %v32, 0
  %v86 = vsel %vm54, %v33, 0
  %v89 = vsel %vm54, %v34, 0
  %v92 = vsel %vm54, %v35, 0
  %v95 = vsel %vm54, %v36, 0
  %v98 = vsel %vm54, %v37, 0
  %v101 = vsel %vm54, %v38, 0
  %103 = vmatprep.subr.mxu0 0.0
  %104 = vmatpush1.msra.mxu0 %v39
  %105 = vmatprep.subr.mxu0 0.0
  %106 = vmatpush1.msra.mxu0 %v40
  %107 = vmatprep.subr.mxu0 0.0
  %108 = vmatpush1.msra.mxu0 %v41
  %109 = vmatprep.subr.mxu0 0.0
  %110 = vmatpush1.msra.mxu0 %v42
  %111 = vmatprep.subr.mxu0 0.0
  %112 = vmatpush1.msra.mxu0 %v43
  %113 = vmatprep.subr.mxu0 0.0
  %114 = vmatpush1.msra.mxu0 %v44
  %115 = vmatprep.subr.mxu0 0.0
  %116 = vmatpush1.msra.mxu0 %v45
  %117 = vmatprep.subr.mxu0 0.0
  %118 = vmatpush1.msra.mxu0 0.0
  %119 = vmatprep.subr.mxu0 0.0
  %120 = vmatpush1.msra.mxu0 0.0
  %121 = vmatprep.subr.mxu0 0.0
  %122 = vmatpush1.msra.mxu0 0.0
  %123 = vmatprep.subr.mxu0 0.0
  %124 = vmatpush1.msra.mxu0 0.0
  %125 = vmatprep.subr.mxu0 0.0
  %126 = vmatpush1.msra.mxu0 0.0
  %127 = vmatprep.subr.mxu0 0.0
  %128 = vmatpush1.msra.mxu0 0.0
  %129 = vmatprep.subr.mxu0 0.0
  %130 = vmatpush1.msra.mxu0 0.0
  %131 = vmatprep.subr.mxu0 0.0
  %132 = vmatpush1.msra.mxu0 0.0
  %133 = vmatprep.subr.mxu0 0.0
  %134 = vmatpush1.msra.mxu0 0.0
  %135 = vmatprep.subr.mxu0 0.0
  %136 = vmatpush1.msra.mxu0 0.0
  %137 = vmatprep.subr.mxu0 0.0
  %138 = vmatpush1.msra.mxu0 0.0
  %139 = vmatprep.subr.mxu0 0.0
  %140 = vmatpush1.msra.mxu0 0.0
  %141 = vmatprep.subr.mxu0 0.0
  %142 = vmatpush1.msra.mxu0 0.0
  %143 = vmatprep.subr.mxu0 0.0
  %144 = vmatpush1.msra.mxu0 0.0
  %145 = vmatprep.subr.mxu0 0.0
  %146 = vmatpush1.msra.mxu0 0.0
  %147 = vmatprep.subr.mxu0 0.0
  %148 = vmatpush1.msra.mxu0 0.0
  %149 = vmatprep.subr.mxu0 0.0
  %150 = vmatpush1.msra.mxu0 0.0
  %151 = vmatprep.subr.mxu0 0.0
  %152 = vmatpush1.msra.mxu0 0.0
  %153 = vmatprep.subr.mxu0 0.0
  %154 = vmatpush1.msra.mxu0 0.0
  %155 = vmatprep.subr.mxu0 0.0
  %156 = vmatpush1.msra.mxu0 0.0
  %157 = vmatprep.subr.mxu0 0.0
  %158 = vmatpush1.msra.mxu0 0.0
  %159 = vmatprep.subr.mxu0 0.0
  %160 = vmatpush1.msra.mxu0 0.0
  %161 = vmatprep.subr.mxu0 0.0
  %162 = vmatpush1.msra.mxu0 0.0
  %163 = vmatprep.subr.mxu0 0.0
  %164 = vmatpush1.msra.mxu0 0.0
  %165 = vmatprep.subr.mxu0 0.0
  %166 = vmatpush1.msra.mxu0 0.0
  %167 = vmatprep.mubr.f32.mxu0 0.0
  %168 = vmatmul.mubr.f32.gmra.mrb[0].mxu0 %v56
  %v169 = vpop.f32.mrb[0].mxu0
  %v170 = vadd.f32 %v53, %v169
  %v171 = vpop.f32.mrb[0].mxu0
  %172 = vmatprep.mubr.f32.mxu0 0.0
  %173 = vmatmul.mubr.f32.gmra.mrb[0].mxu0 %v59
  %v174 = vpop.f32.mrb[0].mxu0
  %v175 = vadd.f32 %v53, %v174
  %v176 = vpop.f32.mrb[0].mxu0
  %177 = vmatprep.mubr.f32.mxu0 0.0
  %178 = vmatmul.mubr.f32.gmra.mrb[0].mxu0 %v62
  %v179 = vpop.f32.mrb[0].mxu0
  %v180 = vadd.f32 %v53, %v179
  %v181 = vpop.f32.mrb[0].mxu0
  %182 = vmatprep.mubr.f32.mxu0 0.0
  %183 = vmatmul.mubr.f32.gmra.mrb[0].mxu0 %v65
  %v184 = vpop.f32.mrb[0].mxu0
  %v185 = vadd.f32 %v53, %v184
  %v186 = vpop.f32.mrb[0].mxu0
  %187 = vmatprep.mubr.f32.mxu0 0.0
  %188 = vmatmul.mubr.f32.gmra.mrb[0].mxu0 %v68
  %v189 = vpop.f32.mrb[0].mxu0
  %v190 = vadd.f32 %v53, %v189
  %v191 = vpop.f32.mrb[0].mxu0
  %192 = vmatprep.mubr.f32.mxu0 0.0
  %193 = vmatmul.mubr.f32.gmra.mrb[0].mxu0 %v71
  %v194 = vpop.f32.mrb[0].mxu0
  %v195 = vadd.f32 %v53, %v194
  %v196 = vpop.f32.mrb[0].mxu0
  %197 = vmatprep.mubr.f32.mxu0 0.0
  %198 = vmatmul.mubr.f32.gmra.mrb[0].mxu0 %v74
  %v199 = vpop.f32.mrb[0].mxu0
  %v200 = vadd.f32 %v53, %v199
  %v201 = vpop.f32.mrb[0].mxu0
  %202 = vmatprep.mubr.f32.mxu0 0.0
  %203 = vmatmul.mubr.f32.gmra.mrb[0].mxu0 %v77
  %v204 = vpop.f32.mrb[0].mxu0
  %v205 = vadd.f32 %v53, %v204
  %v206 = vpop.f32.mrb[0].mxu0
  %207 = vmatprep.mubr.f32.mxu0 0.0
  %208 = vmatmul.mubr.f32.gmra.mrb[0].mxu0 %v80
  %v209 = vpop.f32.mrb[0].mxu0
  %v210 = vadd.f32 %v53, %v209
  %v211 = vpop.f32.mrb[0].mxu0
  %212 = vmatprep.mubr.f32.mxu0 0.0
  %213 = vmatmul.mubr.f32.gmra.mrb[0].mxu0 %v83
  %v214 = vpop.f32.mrb[0].mxu0
  %v215 = vadd.f32 %v53, %v214
  %v216 = vpop.f32.mrb[0].mxu0
  %217 = vmatprep.mubr.f32.mxu0 0.0
  %218 = vmatmul.mubr.f32.gmra.mrb[0].mxu0 %v86
  %v219 = vpop.f32.mrb[0].mxu0
  %v220 = vadd.f32 %v53, %v219
  %v221 = vpop.f32.mrb[0].mxu0
  %222 = vmatprep.mubr.f32.mxu0 0.0
  %223 = vmatmul.mubr.f32.gmra.mrb[0].mxu0 %v89
  %v224 = vpop.f32.mrb[0].mxu0
  %v225 = vadd.f32 %v53, %v224
  %v226 = vpop.f32.mrb[0].mxu0
  %227 = vmatprep.mubr.f32.mxu0 0.0
  %228 = vmatmul.mubr.f32.gmra.mrb[0].mxu0 %v92
  %v229 = vpop.f32.mrb[0].mxu0
  %v230 = vadd.f32 %v53, %v229
  %v231 = vpop.f32.mrb[0].mxu0
  %232 = vmatprep.mubr.f32.mxu0 0.0
  %233 = vmatmul.mubr.f32.gmra.mrb[0].mxu0 %v95
  %v234 = vpop.f32.mrb[0].mxu0
  %v235 = vadd.f32 %v53, %v234
  %v236 = vpop.f32.mrb[0].mxu0
  %237 = vmatprep.mubr.f32.mxu0 0.0
  %238 = vmatmul.mubr.f32.gmra.mrb[0].mxu0 %v98
  %v239 = vpop.f32.mrb[0].mxu0
  %v240 = vadd.f32 %v53, %v239
  %v241 = vpop.f32.mrb[0].mxu0
  %242 = vmatprep.mubr.f32.mxu0 0.0
  %243 = vmatmul.mubr.f32.gmra.mrb[0].mxu0 %v101
  %v244 = vpop.f32.mrb[0].mxu0
  %v245 = vadd.f32 %v53, %v244
  %v246 = vpop.f32.mrb[0].mxu0
  %247 = vdwg.mxu0
  %v248 = vlaneseq
  %v249 = vand.u32 %v248, 127
  %vm250 = vcmp.lt.s32.totalorder %v249, 8
  %v251 = vmax.f32 %v170, 0.0
  %v252 = vmax.f32 %v175, 0.0
  %v253 = vmax.f32 %v180, 0.0
  %v254 = vmax.f32 %v185, 0.0
  %v255 = vmax.f32 %v190, 0.0
  %v256 = vmax.f32 %v195, 0.0
  %v257 = vmax.f32 %v200, 0.0
  %v258 = vmax.f32 %v205, 0.0
  %v259 = vmax.f32 %v210, 0.0
  %v260 = vmax.f32 %v215, 0.0
  %v261 = vmax.f32 %v220, 0.0
  %v262 = vmax.f32 %v225, 0.0
  %v263 = vmax.f32 %v230, 0.0
  %v264 = vmax.f32 %v235, 0.0
  %v265 = vmax.f32 %v240, 0.0
  %v266 = vmax.f32 %v245, 0.0
  %v267 = vtanh.pop %v170
  %v268 = vtanh.pop %v175
  %v269 = vtanh.pop %v180
  %v270 = vtanh.pop %v185
  %v271 = vtanh.pop %v190
  %v272 = vtanh.pop %v195
  %v273 = vtanh.pop %v200
  %v274 = vtanh.pop %v205
  %v275 = vtanh.pop %v210
  %v276 = vtanh.pop %v215
  %v277 = vtanh.pop %v220
  %v278 = vtanh.pop %v225
  %v279 = vtanh.pop %v230
  %v280 = vtanh.pop %v235
  %v281 = vtanh.pop %v240
  %v282 = vtanh.pop %v245
  %v283 = vsel %vm250, %v251, %v267
  %v284 = vsel %vm250, %v252, %v268
  %v285 = vsel %vm250, %v253, %v269
  %v286 = vsel %vm250, %v254, %v270
  %v287 = vsel %vm250, %v255, %v271
  %v288 = vsel %vm250, %v256, %v272
  %v289 = vsel %vm250, %v257, %v273
  %v290 = vsel %vm250, %v258, %v274
  %v291 = vsel %vm250, %v259, %v275
  %v292 = vsel %vm250, %v260, %v276
  %v293 = vsel %vm250, %v261, %v277
  %v294 = vsel %vm250, %v262, %v278
  %v295 = vsel %vm250, %v263, %v279
  %v296 = vsel %vm250, %v264, %v280
  %v297 = vsel %vm250, %v265, %v281
  %v298 = vsel %vm250, %v266, %v282
  %v299 = vlaneseq
  %v300 = vshrl.u32 %v299, 7
  %v301 = vsub.s32 0, %v300
  %v302 = vrot.slane %v49, %v301
  %vm303 = vcmask 130048
  %v305 = vsel %vm303, %v283, 0
  %v308 = vsel %vm303, %v284, 0
  %v311 = vsel %vm303, %v285, 0
  %v314 = vsel %vm303, %v286, 0
  %v317 = vsel %vm303, %v287, 0
  %v320 = vsel %vm303, %v288, 0
  %v323 = vsel %vm303, %v289, 0
  %v326 = vsel %vm303, %v290, 0
  %v329 = vsel %vm303, %v291, 0
  %v332 = vsel %vm303, %v292, 0
  %v335 = vsel %vm303, %v293, 0
  %v338 = vsel %vm303, %v294, 0
  %v341 = vsel %vm303, %v295, 0
  %v344 = vsel %vm303, %v296, 0
  %v347 = vsel %vm303, %v297, 0
  %v350 = vsel %vm303, %v298, 0
  %352 = vmatprep.subr.mxu0 0.0
  %353 = vmatpush1.msra.mxu0 %v46
  %354 = vmatprep.subr.mxu0 0.0
  %355 = vmatpush1.msra.mxu0 %v47
  %356 = vmatprep.subr.mxu0 0.0
  %357 = vmatpush1.msra.mxu0 0.0
  %358 = vmatprep.subr.mxu0 0.0
  %359 = vmatpush1.msra.mxu0 0.0
  %360 = vmatprep.subr.mxu0 0.0
  %361 = vmatpush1.msra.mxu0 0.0
  %362 = vmatprep.subr.mxu0 0.0
  %363 = vmatpush1.msra.mxu0 0.0
  %364 = vmatprep.subr.mxu0 0.0
  %365 = vmatpush1.msra.mxu0 0.0
  %366 = vmatprep.subr.mxu0 0.0
  %367 = vmatpush1.msra.mxu0 0.0
  %368 = vmatprep.subr.mxu0 0.0
  %369 = vmatpush1.msra.mxu0 0.0
  %370 = vmatprep.subr.mxu0 0.0
  %371 = vmatpush1.msra.mxu0 0.0
  %372 = vmatprep.subr.mxu0 0.0
  %373 = vmatpush1.msra.mxu0 0.0
  %374 = vmatprep.subr.mxu0 0.0
  %375 = vmatpush1.msra.mxu0 0.0
  %376 = vmatprep.subr.mxu0 0.0
  %377 = vmatpush1.msra.mxu0 0.0
  %378 = vmatprep.subr.mxu0 0.0
  %379 = vmatpush1.msra.mxu0 0.0
  %380 = vmatprep.subr.mxu0 0.0
  %381 = vmatpush1.msra.mxu0 0.0
  %382 = vmatprep.subr.mxu0 0.0
  %383 = vmatpush1.msra.mxu0 0.0
  %384 = vmatprep.subr.mxu0 0.0
  %385 = vmatpush1.msra.mxu0 0.0
  %386 = vmatprep.subr.mxu0 0.0
  %387 = vmatpush1.msra.mxu0 0.0
  %388 = vmatprep.subr.mxu0 0.0
  %389 = vmatpush1.msra.mxu0 0.0
  %390 = vmatprep.subr.mxu0 0.0
  %391 = vmatpush1.msra.mxu0 0.0
  %392 = vmatprep.subr.mxu0 0.0
  %393 = vmatpush1.msra.mxu0 0.0
  %394 = vmatprep.subr.mxu0 0.0
  %395 = vmatpush1.msra.mxu0 0.0
  %396 = vmatprep.subr.mxu0 0.0
  %397 = vmatpush1.msra.mxu0 0.0
  %398 = vmatprep.subr.mxu0 0.0
  %399 = vmatpush1.msra.mxu0 0.0
  %400 = vmatprep.subr.mxu0 0.0
  %401 = vmatpush1.msra.mxu0 0.0
  %402 = vmatprep.subr.mxu0 0.0
  %403 = vmatpush1.msra.mxu0 0.0
  %404 = vmatprep.subr.mxu0 0.0
  %405 = vmatpush1.msra.mxu0 0.0
  %406 = vmatprep.subr.mxu0 0.0
  %407 = vmatpush1.msra.mxu0 0.0
  %408 = vmatprep.subr.mxu0 0.0
  %409 = vmatpush1.msra.mxu0 0.0
  %410 = vmatprep.subr.mxu0 0.0
  %411 = vmatpush1.msra.mxu0 0.0
  %412 = vmatprep.subr.mxu0 0.0
  %413 = vmatpush1.msra.mxu0 0.0
  %414 = vmatprep.subr.mxu0 0.0
  %415 = vmatpush1.msra.mxu0 0.0
  %416 = vmatprep.mubr.f32.mxu0 0.0
  %417 = vmatmul.mubr.f32.gmra.mrb[0].mxu0 %v305
  %v418 = vpop.f32.mrb[0].mxu0
  %v419 = vadd.f32 %v302, %v418
  %v420 = vpop.f32.mrb[0].mxu0
  %421 = vmatprep.mubr.f32.mxu0 0.0
  %422 = vmatmul.mubr.f32.gmra.mrb[0].mxu0 %v308
  %v423 = vpop.f32.mrb[0].mxu0
  %v424 = vadd.f32 %v302, %v423
  %v425 = vpop.f32.mrb[0].mxu0
  %426 = vmatprep.mubr.f32.mxu0 0.0
  %427 = vmatmul.mubr.f32.gmra.mrb[0].mxu0 %v311
  %v428 = vpop.f32.mrb[0].mxu0
  %v429 = vadd.f32 %v302, %v428
  %v430 = vpop.f32.mrb[0].mxu0
  %431 = vmatprep.mubr.f32.mxu0 0.0
  %432 = vmatmul.mubr.f32.gmra.mrb[0].mxu0 %v314
  %v433 = vpop.f32.mrb[0].mxu0
  %v434 = vadd.f32 %v302, %v433
  %v435 = vpop.f32.mrb[0].mxu0
  %436 = vmatprep.mubr.f32.mxu0 0.0
  %437 = vmatmul.mubr.f32.gmra.mrb[0].mxu0 %v317
  %v438 = vpop.f32.mrb[0].mxu0
  %v439 = vadd.f32 %v302, %v438
  %v440 = vpop.f32.mrb[0].mxu0
  %441 = vmatprep.mubr.f32.mxu0 0.0
  %442 = vmatmul.mubr.f32.gmra.mrb[0].mxu0 %v320
  %v443 = vpop.f32.mrb[0].mxu0
  %v444 = vadd.f32 %v302, %v443
  %v445 = vpop.f32.mrb[0].mxu0
  %446 = vmatprep.mubr.f32.mxu0 0.0
  %447 = vmatmul.mubr.f32.gmra.mrb[0].mxu0 %v323
  %v448 = vpop.f32.mrb[0].mxu0
  %v449 = vadd.f32 %v302, %v448
  %v450 = vpop.f32.mrb[0].mxu0
  %451 = vmatprep.mubr.f32.mxu0 0.0
  %452 = vmatmul.mubr.f32.gmra.mrb[0].mxu0 %v326
  %v453 = vpop.f32.mrb[0].mxu0
  %v454 = vadd.f32 %v302, %v453
  %v455 = vpop.f32.mrb[0].mxu0
  %456 = vmatprep.mubr.f32.mxu0 0.0
  %457 = vmatmul.mubr.f32.gmra.mrb[0].mxu0 %v329
  %v458 = vpop.f32.mrb[0].mxu0
  %v459 = vadd.f32 %v302, %v458
  %v460 = vpop.f32.mrb[0].mxu0
  %461 = vmatprep.mubr.f32.mxu0 0.0
  %462 = vmatmul.mubr.f32.gmra.mrb[0].mxu0 %v332
  %v463 = vpop.f32.mrb[0].mxu0
  %v464 = vadd.f32 %v302, %v463
  %v465 = vpop.f32.mrb[0].mxu0
  %466 = vmatprep.mubr.f32.mxu0 0.0
  %467 = vmatmul.mubr.f32.gmra.mrb[0].mxu0 %v335
  %v468 = vpop.f32.mrb[0].mxu0
  %v469 = vadd.f32 %v302, %v468
  %v470 = vpop.f32.mrb[0].mxu0
  %471 = vmatprep.mubr.f32.mxu0 0.0
  %472 = vmatmul.mubr.f32.gmra.mrb[0].mxu0 %v338
  %v473 = vpop.f32.mrb[0].mxu0
  %v474 = vadd.f32 %v302, %v473
  %v475 = vpop.f32.mrb[0].mxu0
  %476 = vmatprep.mubr.f32.mxu0 0.0
  %477 = vmatmul.mubr.f32.gmra.mrb[0].mxu0 %v341
  %v478 = vpop.f32.mrb[0].mxu0
  %v479 = vadd.f32 %v302, %v478
  %v480 = vpop.f32.mrb[0].mxu0
  %481 = vmatprep.mubr.f32.mxu0 0.0
  %482 = vmatmul.mubr.f32.gmra.mrb[0].mxu0 %v344
  %v483 = vpop.f32.mrb[0].mxu0
  %v484 = vadd.f32 %v302, %v483
  %v485 = vpop.f32.mrb[0].mxu0
  %486 = vmatprep.mubr.f32.mxu0 0.0
  %487 = vmatmul.mubr.f32.gmra.mrb[0].mxu0 %v347
  %v488 = vpop.f32.mrb[0].mxu0
  %v489 = vadd.f32 %v302, %v488
  %v490 = vpop.f32.mrb[0].mxu0
  %491 = vmatprep.mubr.f32.mxu0 0.0
  %492 = vmatmul.mubr.f32.gmra.mrb[0].mxu0 %v350
  %v493 = vpop.f32.mrb[0].mxu0
  %v494 = vadd.f32 %v302, %v493
  %v495 = vpop.f32.mrb[0].mxu0
  %496 = vdwg.mxu0
  %v497 = vmul.f32 %v419, %v419
  %v498 = vmul.f32 %v424, %v424
  %v499 = vmul.f32 %v429, %v429
  %v500 = vmul.f32 %v434, %v434
  %v501 = vadd.f32 %v419, %v439
  %v502 = vadd.f32 %v424, %v444
  %v503 = vadd.f32 %v429, %v449
  %v504 = vadd.f32 %v434, %v454
  %v505 = vmul.f32 %v439, %v439
  %v506 = vmul.f32 %v444, %v444
  %v507 = vmul.f32 %v449, %v449
  %v508 = vmul.f32 %v454, %v454
  %v509 = vadd.f32 %v497, %v505
  %v510 = vadd.f32 %v498, %v506
  %v511 = vadd.f32 %v499, %v507
  %v512 = vadd.f32 %v500, %v508
  %v513 = vmax.f32 %v419, %v439
  %v514 = vmax.f32 %v424, %v444
  %v515 = vmax.f32 %v429, %v449
  %v516 = vmax.f32 %v434, %v454
  %v517 = vmin.f32 %v419, %v439
  %v518 = vmin.f32 %v424, %v444
  %v519 = vmin.f32 %v429, %v449
  %v520 = vmin.f32 %v434, %v454
  %v521 = vadd.f32 %v501, %v459
  %v522 = vadd.f32 %v502, %v464
  %v523 = vadd.f32 %v503, %v469
  %v524 = vadd.f32 %v504, %v474
  %v525 = vmul.f32 %v459, %v459
  %v526 = vmul.f32 %v464, %v464
  %v527 = vmul.f32 %v469, %v469
  %v528 = vmul.f32 %v474, %v474
  %v529 = vadd.f32 %v509, %v525
  %v530 = vadd.f32 %v510, %v526
  %v531 = vadd.f32 %v511, %v527
  %v532 = vadd.f32 %v512, %v528
  %v533 = vmax.f32 %v513, %v459
  %v534 = vmax.f32 %v514, %v464
  %v535 = vmax.f32 %v515, %v469
  %v536 = vmax.f32 %v516, %v474
  %v537 = vmin.f32 %v517, %v459
  %v538 = vmin.f32 %v518, %v464
  %v539 = vmin.f32 %v519, %v469
  %v540 = vmin.f32 %v520, %v474
  %v541 = vadd.f32 %v521, %v479
  %v542 = vadd.f32 %v522, %v484
  %v543 = vadd.f32 %v523, %v489
  %v544 = vadd.f32 %v524, %v494
  %v545 = vmul.f32 %v479, %v479
  %v546 = vmul.f32 %v484, %v484
  %v547 = vmul.f32 %v489, %v489
  %v548 = vmul.f32 %v494, %v494
  %v549 = vadd.f32 %v529, %v545
  %v550 = vadd.f32 %v530, %v546
  %v551 = vadd.f32 %v531, %v547
  %v552 = vadd.f32 %v532, %v548
  %v553 = vmax.f32 %v533, %v479
  %v554 = vmax.f32 %v534, %v484
  %v555 = vmax.f32 %v535, %v489
  %v556 = vmax.f32 %v536, %v494
  %v557 = vmin.f32 %v537, %v479
  %v558 = vmin.f32 %v538, %v484
  %v559 = vmin.f32 %v539, %v489
  %v560 = vmin.f32 %v540, %v494
  %v561 = vmul.f32 %v541, 0.25
  %v562 = vmul.f32 %v542, 0.25
  %v563 = vmul.f32 %v543, 0.25
  %v564 = vmul.f32 %v544, 0.25
  %v565 = vmul.f32 %v549, 0.25
  %v566 = vmul.f32 %v550, 0.25
  %v567 = vmul.f32 %v551, 0.25
  %v568 = vmul.f32 %v552, 0.25
  %v569 = vmul.f32 %v561, %v561
  %v570 = vmul.f32 %v562, %v562
  %v571 = vmul.f32 %v563, %v563
  %v572 = vmul.f32 %v564, %v564
  %v573 = vsub.f32 %v565, %v569
  %v574 = vsub.f32 %v566, %v570
  %v575 = vsub.f32 %v567, %v571
  %v576 = vsub.f32 %v568, %v572
  %v577 = vmax.f32 %v573, 0.0
  %v578 = vmax.f32 %v574, 0.0
  %v579 = vmax.f32 %v575, 0.0
  %v580 = vmax.f32 %v576, 0.0
  %v581 = vadd.f32 %v577, 1e-05
  %v582 = vadd.f32 %v578, 1e-05
  %v583 = vadd.f32 %v579, 1e-05
  %v584 = vadd.f32 %v580, 1e-05
  %v585 = vrsqrt.pop %v581
  %v586 = vmul.f32 %v581, %v585
  %vm587 = vcmp.eq.f32.partialorder %v581, inf
  %v588 = vsel %vm587, %v581, %v586
  %vm589 = vcmp.eq.f32.partialorder %v581, 0.0
  %v590 = vand.u32 %v581, 2147483648
  %v591 = vsel %vm589, %v590, %v588
  %v592 = vrsqrt.pop %v582
  %v593 = vmul.f32 %v582, %v592
  %vm594 = vcmp.eq.f32.partialorder %v582, inf
  %v595 = vsel %vm594, %v582, %v593
  %vm596 = vcmp.eq.f32.partialorder %v582, 0.0
  %v597 = vand.u32 %v582, 2147483648
  %v598 = vsel %vm596, %v597, %v595
  %v599 = vrsqrt.pop %v583
  %v600 = vmul.f32 %v583, %v599
  %vm601 = vcmp.eq.f32.partialorder %v583, inf
  %v602 = vsel %vm601, %v583, %v600
  %vm603 = vcmp.eq.f32.partialorder %v583, 0.0
  %v604 = vand.u32 %v583, 2147483648
  %v605 = vsel %vm603, %v604, %v602
  %v606 = vrsqrt.pop %v584
  %v607 = vmul.f32 %v584, %v606
  %vm608 = vcmp.eq.f32.partialorder %v584, inf
  %v609 = vsel %vm608, %v584, %v607
  %vm610 = vcmp.eq.f32.partialorder %v584, 0.0
  %v611 = vand.u32 %v584, 2147483648
  %v612 = vsel %vm610, %v611, %v609
  %v613 = vld [vmem:[%s1] sm:$0xff]
  %v614 = vld [vmem:[%s1 + $0x8] sm:$0xff]
  %v615 = vld [vmem:[%s1 + $0x10] sm:$0xff]
  %v616 = vld [vmem:[%s1 + $0x18] sm:$0xff]
  %v617 = vld [vmem:[%s4] sm:$0xff]
  %v618 = vld [vmem:[%s4 + $0x8] sm:$0xff]
  %v619 = vld [vmem:[%s4 + $0x10] sm:$0xff]
  %v620 = vld [vmem:[%s4 + $0x18] sm:$0xff]
  %v621 = vld [vmem:[%s4 + $0x20] sm:$0xff]
  %v622 = vld [vmem:[%s4 + $0x28] sm:$0xff]
  %v623 = vld [vmem:[%s4 + $0x30] sm:$0xff]
  %v624 = vld [vmem:[%s4 + $0x38] sm:$0xff]
  %v625 = vld [vmem:[%s4 + $0x40] sm:$0xff]
  %v626 = vld [vmem:[%s4 + $0x48] sm:$0xff]
  %v627 = vld [vmem:[%s4 + $0x50] sm:$0xff]
  %v628 = vld [vmem:[%s4 + $0x58] sm:$0xff]
  %v629 = vld [vmem:[%s4 + $0x60] sm:$0xff]
  %v630 = vld [vmem:[%s4 + $0x68] sm:$0xff]
  %v631 = vld [vmem:[%s4 + $0x70] sm:$0xff]
  %v632 = vld [vmem:[%s5 + $0x2] sm:$0x1]
  %v633 = vld [vmem:[%s5 + $0x3] sm:$0x1]
  %v635 = vsel %vm303, %v561, 0
  %v638 = vsel %vm303, %v562, 0
  %v641 = vsel %vm303, %v563, 0
  %v644 = vsel %vm303, %v564, 0
  %646 = vmatprep.subr.mxu0 0.0
  %647 = vmatpush1.msra.mxu0 %v620
  %648 = vmatprep.subr.mxu0 0.0
  %649 = vmatpush1.msra.mxu0 %v621
  %650 = vmatprep.subr.mxu0 0.0
  %651 = vmatpush1.msra.mxu0 0.0
  %652 = vmatprep.subr.mxu0 0.0
  %653 = vmatpush1.msra.mxu0 0.0
  %654 = vmatprep.subr.mxu0 0.0
  %655 = vmatpush1.msra.mxu0 0.0
  %656 = vmatprep.subr.mxu0 0.0
  %657 = vmatpush1.msra.mxu0 0.0
  %658 = vmatprep.subr.mxu0 0.0
  %659 = vmatpush1.msra.mxu0 0.0
  %660 = vmatprep.subr.mxu0 0.0
  %661 = vmatpush1.msra.mxu0 0.0
  %662 = vmatprep.subr.mxu0 0.0
  %663 = vmatpush1.msra.mxu0 0.0
  %664 = vmatprep.subr.mxu0 0.0
  %665 = vmatpush1.msra.mxu0 0.0
  %666 = vmatprep.subr.mxu0 0.0
  %667 = vmatpush1.msra.mxu0 0.0
  %668 = vmatprep.subr.mxu0 0.0
  %669 = vmatpush1.msra.mxu0 0.0
  %670 = vmatprep.subr.mxu0 0.0
  %671 = vmatpush1.msra.mxu0 0.0
  %672 = vmatprep.subr.mxu0 0.0
  %673 = vmatpush1.msra.mxu0 0.0
  %674 = vmatprep.subr.mxu0 0.0
  %675 = vmatpush1.msra.mxu0 0.0
  %676 = vmatprep.subr.mxu0 0.0
  %677 = vmatpush1.msra.mxu0 0.0
  %678 = vmatprep.subr.mxu0 0.0
  %679 = vmatpush1.msra.mxu0 0.0
  %680 = vmatprep.subr.mxu0 0.0
  %681 = vmatpush1.msra.mxu0 0.0
  %682 = vmatprep.subr.mxu0 0.0
  %683 = vmatpush1.msra.mxu0 0.0
  %684 = vmatprep.subr.mxu0 0.0
  %685 = vmatpush1.msra.mxu0 0.0
  %686 = vmatprep.subr.mxu0 0.0
  %687 = vmatpush1.msra.mxu0 0.0
  %688 = vmatprep.subr.mxu0 0.0
  %689 = vmatpush1.msra.mxu0 0.0
  %690 = vmatprep.subr.mxu0 0.0
  %691 = vmatpush1.msra.mxu0 0.0
  %692 = vmatprep.subr.mxu0 0.0
  %693 = vmatpush1.msra.mxu0 0.0
  %694 = vmatprep.subr.mxu0 0.0
  %695 = vmatpush1.msra.mxu0 0.0
  %696 = vmatprep.subr.mxu0 0.0
  %697 = vmatpush1.msra.mxu0 0.0
  %698 = vmatprep.subr.mxu0 0.0
  %699 = vmatpush1.msra.mxu0 0.0
  %700 = vmatprep.subr.mxu0 0.0
  %701 = vmatpush1.msra.mxu0 0.0
  %702 = vmatprep.subr.mxu0 0.0
  %703 = vmatpush1.msra.mxu0 0.0
  %704 = vmatprep.subr.mxu0 0.0
  %705 = vmatpush1.msra.mxu0 0.0
  %706 = vmatprep.subr.mxu0 0.0
  %707 = vmatpush1.msra.mxu0 0.0
  %708 = vmatprep.subr.mxu0 0.0
  %709 = vmatpush1.msra.mxu0 0.0
  %710 = vmatprep.mubr.f32.mxu0 0.0
  %711 = vmatmul.mubr.f32.gmra.mrb[0].mxu0 %v635
  %v712 = vpop.f32.mrb[0].mxu0
  %v713 = vadd.f32 0.0, %v712
  %v714 = vpop.f32.mrb[0].mxu0
  %715 = vmatprep.mubr.f32.mxu0 0.0
  %716 = vmatmul.mubr.f32.gmra.mrb[0].mxu0 %v638
  %v717 = vpop.f32.mrb[0].mxu0
  %v718 = vadd.f32 0.0, %v717
  %v719 = vpop.f32.mrb[0].mxu0
  %720 = vmatprep.mubr.f32.mxu0 0.0
  %721 = vmatmul.mubr.f32.gmra.mrb[0].mxu0 %v641
  %v722 = vpop.f32.mrb[0].mxu0
  %v723 = vadd.f32 0.0, %v722
  %v724 = vpop.f32.mrb[0].mxu0
  %725 = vmatprep.mubr.f32.mxu0 0.0
  %726 = vmatmul.mubr.f32.gmra.mrb[0].mxu0 %v644
  %v727 = vpop.f32.mrb[0].mxu0
  %v728 = vadd.f32 0.0, %v727
  %v729 = vpop.f32.mrb[0].mxu0
  %730 = vdwg.mxu0
  %vm731 = vcmask 195584
  %v733 = vsel %vm731, %v613, 0
  %v736 = vsel %vm731, %v614, 0
  %v739 = vsel %vm731, %v615, 0
  %v742 = vsel %vm731, %v616, 0
  %744 = vmatprep.subr.mxu0 0.0
  %745 = vmatpush1.msra.mxu0 %v617
  %746 = vmatprep.subr.mxu0 0.0
  %747 = vmatpush1.msra.mxu0 %v618
  %748 = vmatprep.subr.mxu0 0.0
  %749 = vmatpush1.msra.mxu0 %v619
  %750 = vmatprep.subr.mxu0 0.0
  %751 = vmatpush1.msra.mxu0 0.0
  %752 = vmatprep.subr.mxu0 0.0
  %753 = vmatpush1.msra.mxu0 0.0
  %754 = vmatprep.subr.mxu0 0.0
  %755 = vmatpush1.msra.mxu0 0.0
  %756 = vmatprep.subr.mxu0 0.0
  %757 = vmatpush1.msra.mxu0 0.0
  %758 = vmatprep.subr.mxu0 0.0
  %759 = vmatpush1.msra.mxu0 0.0
  %760 = vmatprep.subr.mxu0 0.0
  %761 = vmatpush1.msra.mxu0 0.0
  %762 = vmatprep.subr.mxu0 0.0
  %763 = vmatpush1.msra.mxu0 0.0
  %764 = vmatprep.subr.mxu0 0.0
  %765 = vmatpush1.msra.mxu0 0.0
  %766 = vmatprep.subr.mxu0 0.0
  %767 = vmatpush1.msra.mxu0 0.0
  %768 = vmatprep.subr.mxu0 0.0
  %769 = vmatpush1.msra.mxu0 0.0
  %770 = vmatprep.subr.mxu0 0.0
  %771 = vmatpush1.msra.mxu0 0.0
  %772 = vmatprep.subr.mxu0 0.0
  %773 = vmatpush1.msra.mxu0 0.0
  %774 = vmatprep.subr.mxu0 0.0
  %775 = vmatpush1.msra.mxu0 0.0
  %776 = vmatprep.subr.mxu0 0.0
  %777 = vmatpush1.msra.mxu0 0.0
  %778 = vmatprep.subr.mxu0 0.0
  %779 = vmatpush1.msra.mxu0 0.0
  %780 = vmatprep.subr.mxu0 0.0
  %781 = vmatpush1.msra.mxu0 0.0
  %782 = vmatprep.subr.mxu0 0.0
  %783 = vmatpush1.msra.mxu0 0.0
  %784 = vmatprep.subr.mxu0 0.0
  %785 = vmatpush1.msra.mxu0 0.0
  %786 = vmatprep.subr.mxu0 0.0
  %787 = vmatpush1.msra.mxu0 0.0
  %788 = vmatprep.subr.mxu0 0.0
  %789 = vmatpush1.msra.mxu0 0.0
  %790 = vmatprep.subr.mxu0 0.0
  %791 = vmatpush1.msra.mxu0 0.0
  %792 = vmatprep.subr.mxu0 0.0
  %793 = vmatpush1.msra.mxu0 0.0
  %794 = vmatprep.subr.mxu0 0.0
  %795 = vmatpush1.msra.mxu0 0.0
  %796 = vmatprep.subr.mxu0 0.0
  %797 = vmatpush1.msra.mxu0 0.0
  %798 = vmatprep.subr.mxu0 0.0
  %799 = vmatpush1.msra.mxu0 0.0
  %800 = vmatprep.subr.mxu0 0.0
  %801 = vmatpush1.msra.mxu0 0.0
  %802 = vmatprep.subr.mxu0 0.0
  %803 = vmatpush1.msra.mxu0 0.0
  %804 = vmatprep.subr.mxu0 0.0
  %805 = vmatpush1.msra.mxu0 0.0
  %806 = vmatprep.subr.mxu0 0.0
  %807 = vmatpush1.msra.mxu0 0.0
  %808 = vmatprep.mubr.f32.mxu0 0.0
  %809 = vmatmul.mubr.f32.gmra.mrb[0].mxu0 %v733
  %v810 = vpop.f32.mrb[0].mxu0
  %v811 = vadd.f32 %v713, %v810
  %v812 = vpop.f32.mrb[0].mxu0
  %813 = vmatprep.mubr.f32.mxu0 0.0
  %814 = vmatmul.mubr.f32.gmra.mrb[0].mxu0 %v736
  %v815 = vpop.f32.mrb[0].mxu0
  %v816 = vadd.f32 %v718, %v815
  %v817 = vpop.f32.mrb[0].mxu0
  %818 = vmatprep.mubr.f32.mxu0 0.0
  %819 = vmatmul.mubr.f32.gmra.mrb[0].mxu0 %v739
  %v820 = vpop.f32.mrb[0].mxu0
  %v821 = vadd.f32 %v723, %v820
  %v822 = vpop.f32.mrb[0].mxu0
  %823 = vmatprep.mubr.f32.mxu0 0.0
  %824 = vmatmul.mubr.f32.gmra.mrb[0].mxu0 %v742
  %v825 = vpop.f32.mrb[0].mxu0
  %v826 = vadd.f32 %v728, %v825
  %v827 = vpop.f32.mrb[0].mxu0
  %828 = vdwg.mxu0
  %v830 = vsel %vm303, %v553, 0
  %v833 = vsel %vm303, %v554, 0
  %v836 = vsel %vm303, %v555, 0
  %v839 = vsel %vm303, %v556, 0
  %841 = vmatprep.subr.mxu0 0.0
  %842 = vmatpush1.msra.mxu0 %v622
  %843 = vmatprep.subr.mxu0 0.0
  %844 = vmatpush1.msra.mxu0 %v623
  %845 = vmatprep.subr.mxu0 0.0
  %846 = vmatpush1.msra.mxu0 0.0
  %847 = vmatprep.subr.mxu0 0.0
  %848 = vmatpush1.msra.mxu0 0.0
  %849 = vmatprep.subr.mxu0 0.0
  %850 = vmatpush1.msra.mxu0 0.0
  %851 = vmatprep.subr.mxu0 0.0
  %852 = vmatpush1.msra.mxu0 0.0
  %853 = vmatprep.subr.mxu0 0.0
  %854 = vmatpush1.msra.mxu0 0.0
  %855 = vmatprep.subr.mxu0 0.0
  %856 = vmatpush1.msra.mxu0 0.0
  %857 = vmatprep.subr.mxu0 0.0
  %858 = vmatpush1.msra.mxu0 0.0
  %859 = vmatprep.subr.mxu0 0.0
  %860 = vmatpush1.msra.mxu0 0.0
  %861 = vmatprep.subr.mxu0 0.0
  %862 = vmatpush1.msra.mxu0 0.0
  %863 = vmatprep.subr.mxu0 0.0
  %864 = vmatpush1.msra.mxu0 0.0
  %865 = vmatprep.subr.mxu0 0.0
  %866 = vmatpush1.msra.mxu0 0.0
  %867 = vmatprep.subr.mxu0 0.0
  %868 = vmatpush1.msra.mxu0 0.0
  %869 = vmatprep.subr.mxu0 0.0
  %870 = vmatpush1.msra.mxu0 0.0
  %871 = vmatprep.subr.mxu0 0.0
  %872 = vmatpush1.msra.mxu0 0.0
  %873 = vmatprep.subr.mxu0 0.0
  %874 = vmatpush1.msra.mxu0 0.0
  %875 = vmatprep.subr.mxu0 0.0
  %876 = vmatpush1.msra.mxu0 0.0
  %877 = vmatprep.subr.mxu0 0.0
  %878 = vmatpush1.msra.mxu0 0.0
  %879 = vmatprep.subr.mxu0 0.0
  %880 = vmatpush1.msra.mxu0 0.0
  %881 = vmatprep.subr.mxu0 0.0
  %882 = vmatpush1.msra.mxu0 0.0
  %883 = vmatprep.subr.mxu0 0.0
  %884 = vmatpush1.msra.mxu0 0.0
  %885 = vmatprep.subr.mxu0 0.0
  %886 = vmatpush1.msra.mxu0 0.0
  %887 = vmatprep.subr.mxu0 0.0
  %888 = vmatpush1.msra.mxu0 0.0
  %889 = vmatprep.subr.mxu0 0.0
  %890 = vmatpush1.msra.mxu0 0.0
  %891 = vmatprep.subr.mxu0 0.0
  %892 = vmatpush1.msra.mxu0 0.0
  %893 = vmatprep.subr.mxu0 0.0
  %894 = vmatpush1.msra.mxu0 0.0
  %895 = vmatprep.subr.mxu0 0.0
  %896 = vmatpush1.msra.mxu0 0.0
  %897 = vmatprep.subr.mxu0 0.0
  %898 = vmatpush1.msra.mxu0 0.0
  %899 = vmatprep.subr.mxu0 0.0
  %900 = vmatpush1.msra.mxu0 0.0
  %901 = vmatprep.subr.mxu0 0.0
  %902 = vmatpush1.msra.mxu0 0.0
  %903 = vmatprep.subr.mxu0 0.0
  %904 = vmatpush1.msra.mxu0 0.0
  %905 = vmatprep.mubr.f32.mxu0 0.0
  %906 = vmatmul.mubr.f32.gmra.mrb[0].mxu0 %v830
  %v907 = vpop.f32.mrb[0].mxu0
  %v908 = vadd.f32 0.0, %v907
  %v909 = vpop.f32.mrb[0].mxu0
  %910 = vmatprep.mubr.f32.mxu0 0.0
  %911 = vmatmul.mubr.f32.gmra.mrb[0].mxu0 %v833
  %v912 = vpop.f32.mrb[0].mxu0
  %v913 = vadd.f32 0.0, %v912
  %v914 = vpop.f32.mrb[0].mxu0
  %915 = vmatprep.mubr.f32.mxu0 0.0
  %916 = vmatmul.mubr.f32.gmra.mrb[0].mxu0 %v836
  %v917 = vpop.f32.mrb[0].mxu0
  %v918 = vadd.f32 0.0, %v917
  %v919 = vpop.f32.mrb[0].mxu0
  %920 = vmatprep.mubr.f32.mxu0 0.0
  %921 = vmatmul.mubr.f32.gmra.mrb[0].mxu0 %v839
  %v922 = vpop.f32.mrb[0].mxu0
  %v923 = vadd.f32 0.0, %v922
  %v924 = vpop.f32.mrb[0].mxu0
  %925 = vdwg.mxu0
  %v926 = vadd.f32 %v811, %v908
  %v927 = vadd.f32 %v816, %v913
  %v928 = vadd.f32 %v821, %v918
  %v929 = vadd.f32 %v826, %v923
  %v931 = vsel %vm303, %v557, 0
  %v934 = vsel %vm303, %v558, 0
  %v937 = vsel %vm303, %v559, 0
  %v940 = vsel %vm303, %v560, 0
  %942 = vmatprep.subr.mxu0 0.0
  %943 = vmatpush1.msra.mxu0 %v624
  %944 = vmatprep.subr.mxu0 0.0
  %945 = vmatpush1.msra.mxu0 %v625
  %946 = vmatprep.subr.mxu0 0.0
  %947 = vmatpush1.msra.mxu0 0.0
  %948 = vmatprep.subr.mxu0 0.0
  %949 = vmatpush1.msra.mxu0 0.0
  %950 = vmatprep.subr.mxu0 0.0
  %951 = vmatpush1.msra.mxu0 0.0
  %952 = vmatprep.subr.mxu0 0.0
  %953 = vmatpush1.msra.mxu0 0.0
  %954 = vmatprep.subr.mxu0 0.0
  %955 = vmatpush1.msra.mxu0 0.0
  %956 = vmatprep.subr.mxu0 0.0
  %957 = vmatpush1.msra.mxu0 0.0
  %958 = vmatprep.subr.mxu0 0.0
  %959 = vmatpush1.msra.mxu0 0.0
  %960 = vmatprep.subr.mxu0 0.0
  %961 = vmatpush1.msra.mxu0 0.0
  %962 = vmatprep.subr.mxu0 0.0
  %963 = vmatpush1.msra.mxu0 0.0
  %964 = vmatprep.subr.mxu0 0.0
  %965 = vmatpush1.msra.mxu0 0.0
  %966 = vmatprep.subr.mxu0 0.0
  %967 = vmatpush1.msra.mxu0 0.0
  %968 = vmatprep.subr.mxu0 0.0
  %969 = vmatpush1.msra.mxu0 0.0
  %970 = vmatprep.subr.mxu0 0.0
  %971 = vmatpush1.msra.mxu0 0.0
  %972 = vmatprep.subr.mxu0 0.0
  %973 = vmatpush1.msra.mxu0 0.0
  %974 = vmatprep.subr.mxu0 0.0
  %975 = vmatpush1.msra.mxu0 0.0
  %976 = vmatprep.subr.mxu0 0.0
  %977 = vmatpush1.msra.mxu0 0.0
  %978 = vmatprep.subr.mxu0 0.0
  %979 = vmatpush1.msra.mxu0 0.0
  %980 = vmatprep.subr.mxu0 0.0
  %981 = vmatpush1.msra.mxu0 0.0
  %982 = vmatprep.subr.mxu0 0.0
  %983 = vmatpush1.msra.mxu0 0.0
  %984 = vmatprep.subr.mxu0 0.0
  %985 = vmatpush1.msra.mxu0 0.0
  %986 = vmatprep.subr.mxu0 0.0
  %987 = vmatpush1.msra.mxu0 0.0
  %988 = vmatprep.subr.mxu0 0.0
  %989 = vmatpush1.msra.mxu0 0.0
  %990 = vmatprep.subr.mxu0 0.0
  %991 = vmatpush1.msra.mxu0 0.0
  %992 = vmatprep.subr.mxu0 0.0
  %993 = vmatpush1.msra.mxu0 0.0
  %994 = vmatprep.subr.mxu0 0.0
  %995 = vmatpush1.msra.mxu0 0.0
  %996 = vmatprep.subr.mxu0 0.0
  %997 = vmatpush1.msra.mxu0 0.0
  %998 = vmatprep.subr.mxu0 0.0
  %999 = vmatpush1.msra.mxu0 0.0
  %1000 = vmatprep.subr.mxu0 0.0
  %1001 = vmatpush1.msra.mxu0 0.0
  %1002 = vmatprep.subr.mxu0 0.0
  %1003 = vmatpush1.msra.mxu0 0.0
  %1004 = vmatprep.subr.mxu0 0.0
  %1005 = vmatpush1.msra.mxu0 0.0
  %1006 = vmatprep.mubr.f32.mxu0 0.0
  %1007 = vmatmul.mubr.f32.gmra.mrb[0].mxu0 %v931
  %v1008 = vpop.f32.mrb[0].mxu0
  %v1009 = vadd.f32 0.0, %v1008
  %v1010 = vpop.f32.mrb[0].mxu0
  %1011 = vmatprep.mubr.f32.mxu0 0.0
  %1012 = vmatmul.mubr.f32.gmra.mrb[0].mxu0 %v934
  %v1013 = vpop.f32.mrb[0].mxu0
  %v1014 = vadd.f32 0.0, %v1013
  %v1015 = vpop.f32.mrb[0].mxu0
  %1016 = vmatprep.mubr.f32.mxu0 0.0
  %1017 = vmatmul.mubr.f32.gmra.mrb[0].mxu0 %v937
  %v1018 = vpop.f32.mrb[0].mxu0
  %v1019 = vadd.f32 0.0, %v1018
  %v1020 = vpop.f32.mrb[0].mxu0
  %1021 = vmatprep.mubr.f32.mxu0 0.0
  %1022 = vmatmul.mubr.f32.gmra.mrb[0].mxu0 %v940
  %v1023 = vpop.f32.mrb[0].mxu0
  %v1024 = vadd.f32 0.0, %v1023
  %v1025 = vpop.f32.mrb[0].mxu0
  %1026 = vdwg.mxu0
  %v1027 = vadd.f32 %v926, %v1009
  %v1028 = vadd.f32 %v927, %v1014
  %v1029 = vadd.f32 %v928, %v1019
  %v1030 = vadd.f32 %v929, %v1024
  %v1032 = vsel %vm303, %v591, 0
  %v1035 = vsel %vm303, %v598, 0
  %v1038 = vsel %vm303, %v605, 0
  %v1041 = vsel %vm303, %v612, 0
  %1043 = vmatprep.subr.mxu0 0.0
  %1044 = vmatpush1.msra.mxu0 %v626
  %1045 = vmatprep.subr.mxu0 0.0
  %1046 = vmatpush1.msra.mxu0 %v627
  %1047 = vmatprep.subr.mxu0 0.0
  %1048 = vmatpush1.msra.mxu0 0.0
  %1049 = vmatprep.subr.mxu0 0.0
  %1050 = vmatpush1.msra.mxu0 0.0
  %1051 = vmatprep.subr.mxu0 0.0
  %1052 = vmatpush1.msra.mxu0 0.0
  %1053 = vmatprep.subr.mxu0 0.0
  %1054 = vmatpush1.msra.mxu0 0.0
  %1055 = vmatprep.subr.mxu0 0.0
  %1056 = vmatpush1.msra.mxu0 0.0
  %1057 = vmatprep.subr.mxu0 0.0
  %1058 = vmatpush1.msra.mxu0 0.0
  %1059 = vmatprep.subr.mxu0 0.0
  %1060 = vmatpush1.msra.mxu0 0.0
  %1061 = vmatprep.subr.mxu0 0.0
  %1062 = vmatpush1.msra.mxu0 0.0
  %1063 = vmatprep.subr.mxu0 0.0
  %1064 = vmatpush1.msra.mxu0 0.0
  %1065 = vmatprep.subr.mxu0 0.0
  %1066 = vmatpush1.msra.mxu0 0.0
  %1067 = vmatprep.subr.mxu0 0.0
  %1068 = vmatpush1.msra.mxu0 0.0
  %1069 = vmatprep.subr.mxu0 0.0
  %1070 = vmatpush1.msra.mxu0 0.0
  %1071 = vmatprep.subr.mxu0 0.0
  %1072 = vmatpush1.msra.mxu0 0.0
  %1073 = vmatprep.subr.mxu0 0.0
  %1074 = vmatpush1.msra.mxu0 0.0
  %1075 = vmatprep.subr.mxu0 0.0
  %1076 = vmatpush1.msra.mxu0 0.0
  %1077 = vmatprep.subr.mxu0 0.0
  %1078 = vmatpush1.msra.mxu0 0.0
  %1079 = vmatprep.subr.mxu0 0.0
  %1080 = vmatpush1.msra.mxu0 0.0
  %1081 = vmatprep.subr.mxu0 0.0
  %1082 = vmatpush1.msra.mxu0 0.0
  %1083 = vmatprep.subr.mxu0 0.0
  %1084 = vmatpush1.msra.mxu0 0.0
  %1085 = vmatprep.subr.mxu0 0.0
  %1086 = vmatpush1.msra.mxu0 0.0
  %1087 = vmatprep.subr.mxu0 0.0
  %1088 = vmatpush1.msra.mxu0 0.0
  %1089 = vmatprep.subr.mxu0 0.0
  %1090 = vmatpush1.msra.mxu0 0.0
  %1091 = vmatprep.subr.mxu0 0.0
  %1092 = vmatpush1.msra.mxu0 0.0
  %1093 = vmatprep.subr.mxu0 0.0
  %1094 = vmatpush1.msra.mxu0 0.0
  %1095 = vmatprep.subr.mxu0 0.0
  %1096 = vmatpush1.msra.mxu0 0.0
  %1097 = vmatprep.subr.mxu0 0.0
  %1098 = vmatpush1.msra.mxu0 0.0
  %1099 = vmatprep.subr.mxu0 0.0
  %1100 = vmatpush1.msra.mxu0 0.0
  %1101 = vmatprep.subr.mxu0 0.0
  %1102 = vmatpush1.msra.mxu0 0.0
  %1103 = vmatprep.subr.mxu0 0.0
  %1104 = vmatpush1.msra.mxu0 0.0
  %1105 = vmatprep.subr.mxu0 0.0
  %1106 = vmatpush1.msra.mxu0 0.0
  %1107 = vmatprep.mubr.f32.mxu0 0.0
  %1108 = vmatmul.mubr.f32.gmra.mrb[0].mxu0 %v1032
  %v1109 = vpop.f32.mrb[0].mxu0
  %v1110 = vadd.f32 0.0, %v1109
  %v1111 = vpop.f32.mrb[0].mxu0
  %1112 = vmatprep.mubr.f32.mxu0 0.0
  %1113 = vmatmul.mubr.f32.gmra.mrb[0].mxu0 %v1035
  %v1114 = vpop.f32.mrb[0].mxu0
  %v1115 = vadd.f32 0.0, %v1114
  %v1116 = vpop.f32.mrb[0].mxu0
  %1117 = vmatprep.mubr.f32.mxu0 0.0
  %1118 = vmatmul.mubr.f32.gmra.mrb[0].mxu0 %v1038
  %v1119 = vpop.f32.mrb[0].mxu0
  %v1120 = vadd.f32 0.0, %v1119
  %v1121 = vpop.f32.mrb[0].mxu0
  %1122 = vmatprep.mubr.f32.mxu0 0.0
  %1123 = vmatmul.mubr.f32.gmra.mrb[0].mxu0 %v1041
  %v1124 = vpop.f32.mrb[0].mxu0
  %v1125 = vadd.f32 0.0, %v1124
  %v1126 = vpop.f32.mrb[0].mxu0
  %1127 = vdwg.mxu0
  %v1128 = vadd.f32 %v1027, %v1110
  %v1129 = vadd.f32 %v1028, %v1115
  %v1130 = vadd.f32 %v1029, %v1120
  %v1131 = vadd.f32 %v1030, %v1125
  %v1132 = vlaneseq
  %v1133 = vshrl.u32 %v1132, 7
  %v1134 = vsub.s32 0, %v1133
  %v1135 = vrot.slane %v632, %v1134
  %v1136 = vadd.f32 %v1128, %v1135
  %v1137 = vadd.f32 %v1129, %v1135
  %v1138 = vadd.f32 %v1130, %v1135
  %v1139 = vadd.f32 %v1131, %v1135
  %vm1140 = vcmp.lt.s32.totalorder %v249, 16
  %v1141 = vmax.f32 %v1136, 0.0
  %v1142 = vmax.f32 %v1137, 0.0
  %v1143 = vmax.f32 %v1138, 0.0
  %v1144 = vmax.f32 %v1139, 0.0
  %v1145 = vtanh.pop %v1136
  %v1146 = vtanh.pop %v1137
  %v1147 = vtanh.pop %v1138
  %v1148 = vtanh.pop %v1139
  %v1149 = vsel %vm1140, %v1141, %v1145
  %v1150 = vsel %vm1140, %v1142, %v1146
  %v1151 = vsel %vm1140, %v1143, %v1147
  %v1152 = vsel %vm1140, %v1144, %v1148
  %v1153 = vlaneseq
  %v1154 = vshrl.u32 %v1153, 7
  %v1155 = vsub.s32 0, %v1154
  %v1156 = vrot.slane %v633, %v1155
  %vm1157 = vcmask 261120
  %v1159 = vsel %vm1157, %v1149, 0
  %v1162 = vsel %vm1157, %v1150, 0
  %v1165 = vsel %vm1157, %v1151, 0
  %v1168 = vsel %vm1157, %v1152, 0
  %1170 = vmatprep.subr.mxu0 0.0
  %1171 = vmatpush1.msra.mxu0 %v628
  %1172 = vmatprep.subr.mxu0 0.0
  %1173 = vmatpush1.msra.mxu0 %v629
  %1174 = vmatprep.subr.mxu0 0.0
  %1175 = vmatpush1.msra.mxu0 %v630
  %1176 = vmatprep.subr.mxu0 0.0
  %1177 = vmatpush1.msra.mxu0 %v631
  %1178 = vmatprep.subr.mxu0 0.0
  %1179 = vmatpush1.msra.mxu0 0.0
  %1180 = vmatprep.subr.mxu0 0.0
  %1181 = vmatpush1.msra.mxu0 0.0
  %1182 = vmatprep.subr.mxu0 0.0
  %1183 = vmatpush1.msra.mxu0 0.0
  %1184 = vmatprep.subr.mxu0 0.0
  %1185 = vmatpush1.msra.mxu0 0.0
  %1186 = vmatprep.subr.mxu0 0.0
  %1187 = vmatpush1.msra.mxu0 0.0
  %1188 = vmatprep.subr.mxu0 0.0
  %1189 = vmatpush1.msra.mxu0 0.0
  %1190 = vmatprep.subr.mxu0 0.0
  %1191 = vmatpush1.msra.mxu0 0.0
  %1192 = vmatprep.subr.mxu0 0.0
  %1193 = vmatpush1.msra.mxu0 0.0
  %1194 = vmatprep.subr.mxu0 0.0
  %1195 = vmatpush1.msra.mxu0 0.0
  %1196 = vmatprep.subr.mxu0 0.0
  %1197 = vmatpush1.msra.mxu0 0.0
  %1198 = vmatprep.subr.mxu0 0.0
  %1199 = vmatpush1.msra.mxu0 0.0
  %1200 = vmatprep.subr.mxu0 0.0
  %1201 = vmatpush1.msra.mxu0 0.0
  %1202 = vmatprep.subr.mxu0 0.0
  %1203 = vmatpush1.msra.mxu0 0.0
  %1204 = vmatprep.subr.mxu0 0.0
  %1205 = vmatpush1.msra.mxu0 0.0
  %1206 = vmatprep.subr.mxu0 0.0
  %1207 = vmatpush1.msra.mxu0 0.0
  %1208 = vmatprep.subr.mxu0 0.0
  %1209 = vmatpush1.msra.mxu0 0.0
  %1210 = vmatprep.subr.mxu0 0.0
  %1211 = vmatpush1.msra.mxu0 0.0
  %1212 = vmatprep.subr.mxu0 0.0
  %1213 = vmatpush1.msra.mxu0 0.0
  %1214 = vmatprep.subr.mxu0 0.0
  %1215 = vmatpush1.msra.mxu0 0.0
  %1216 = vmatprep.subr.mxu0 0.0
  %1217 = vmatpush1.msra.mxu0 0.0
  %1218 = vmatprep.subr.mxu0 0.0
  %1219 = vmatpush1.msra.mxu0 0.0
  %1220 = vmatprep.subr.mxu0 0.0
  %1221 = vmatpush1.msra.mxu0 0.0
  %1222 = vmatprep.subr.mxu0 0.0
  %1223 = vmatpush1.msra.mxu0 0.0
  %1224 = vmatprep.subr.mxu0 0.0
  %1225 = vmatpush1.msra.mxu0 0.0
  %1226 = vmatprep.subr.mxu0 0.0
  %1227 = vmatpush1.msra.mxu0 0.0
  %1228 = vmatprep.subr.mxu0 0.0
  %1229 = vmatpush1.msra.mxu0 0.0
  %1230 = vmatprep.subr.mxu0 0.0
  %1231 = vmatpush1.msra.mxu0 0.0
  %1232 = vmatprep.subr.mxu0 0.0
  %1233 = vmatpush1.msra.mxu0 0.0
  %1234 = vmatprep.mubr.f32.mxu0 0.0
  %1235 = vmatmul.mubr.f32.gmra.mrb[0].mxu0 %v1159
  %v1236 = vpop.f32.mrb[0].mxu0
  %v1237 = vadd.f32 %v1156, %v1236
  %v1238 = vpop.f32.mrb[0].mxu0
  %1239 = vmatprep.mubr.f32.mxu0 0.0
  %1240 = vmatmul.mubr.f32.gmra.mrb[0].mxu0 %v1162
  %v1241 = vpop.f32.mrb[0].mxu0
  %v1242 = vadd.f32 %v1156, %v1241
  %v1243 = vpop.f32.mrb[0].mxu0
  %1244 = vmatprep.mubr.f32.mxu0 0.0
  %1245 = vmatmul.mubr.f32.gmra.mrb[0].mxu0 %v1165
  %v1246 = vpop.f32.mrb[0].mxu0
  %v1247 = vadd.f32 %v1156, %v1246
  %v1248 = vpop.f32.mrb[0].mxu0
  %1249 = vmatprep.mubr.f32.mxu0 0.0
  %1250 = vmatmul.mubr.f32.gmra.mrb[0].mxu0 %v1168
  %v1251 = vpop.f32.mrb[0].mxu0
  %v1252 = vadd.f32 %v1156, %v1251
  %v1253 = vpop.f32.mrb[0].mxu0
  %1254 = vdwg.mxu0
  %v1255 = vld [vmem:[%s2] sm:$0xff]
  %v1256 = vld [vmem:[%s2 + $0x8] sm:$0xff]
  %v1257 = vld [vmem:[%s2 + $0x10] sm:$0xff]
  %v1258 = vld [vmem:[%s2 + $0x18] sm:$0xff]
  %1260 = vset.pattern.permute.xlu0 0
  %1261 = vperm.xlu0 %1260, %v1255
  %v1262 = vpop.permute.xlu0 %1261
  %1265 = vset.pattern.permute.xlu0 0
  %1266 = vperm.xlu0 %1265, %v1256
  %v1267 = vpop.permute.xlu0 %1266
  %1270 = vset.pattern.permute.xlu0 0
  %1271 = vperm.xlu0 %1270, %v1257
  %v1272 = vpop.permute.xlu0 %1271
  %1275 = vset.pattern.permute.xlu0 0
  %1276 = vperm.xlu0 %1275, %v1258
  %v1277 = vpop.permute.xlu0 %1276
  %v1279 = vsel %vm1140, %v1262, 1.0
  %v1280 = vsel %vm1140, %v1267, 1.0
  %v1281 = vsel %vm1140, %v1272, 1.0
  %v1282 = vsel %vm1140, %v1277, 1.0
  %v1283 = vmul.f32 %v1237, %v1279
  %v1284 = vmul.f32 %v1242, %v1280
  %v1285 = vmul.f32 %v1247, %v1281
  %v1286 = vmul.f32 %v1252, %v1282
  %v1287 = vld [vmem:[%s5 + $0x4] sm:$0x1]
  %v1288 = vlaneseq
  %v1289 = vshrl.u32 %v1288, 7
  %v1290 = vsub.s32 0, %v1289
  %v1291 = vrot.slane %v1287, %v1290
  %v1292 = vmul.f32 %v1283, %v1291
  %v1293 = vmul.f32 %v1284, %v1291
  %v1294 = vmul.f32 %v1285, %v1291
  %v1295 = vmul.f32 %v1286, %v1291
  %v1296 = vld [vmem:[%s5 + $0x5] sm:$0x1]
  %v1297 = vlaneseq
  %v1298 = vshrl.u32 %v1297, 7
  %v1299 = vsub.s32 0, %v1298
  %v1300 = vrot.slane %v1296, %v1299
  %v1301 = vadd.f32 %v1292, %v1300
  %v1302 = vadd.f32 %v1293, %v1300
  %v1303 = vadd.f32 %v1294, %v1300
  %v1304 = vadd.f32 %v1295, %v1300
  %1305 = vst.msk [vmem:[%s6] sm:$0xff] %vm1157, %v1301
  %1306 = vst.msk [vmem:[%s6 + $0x8] sm:$0xff] %vm1157, %v1302
  %1307 = vst.msk [vmem:[%s6 + $0x10] sm:$0xff] %vm1157, %v1303
  %1308 = vst.msk [vmem:[%s6 + $0x18] sm:$0xff] %vm1157, %v1304
  // Predicated region
  $region26: #{pna_tower_forward.1} parent=0 // pred_check
    _
  $region27: #{pna_tower_forward.1} parent=0 // pred_check_branch
    %1310 = sbr.rel (0) target = $region29
  $region28: #{pna_tower_forward.1} parent=0 // pred_region
    _
  $region29: #{pna_tower_forward.1} parent=0 // pred_fallthru
    _
  // Predicated region
  $region30: #{pna_tower_forward.1} parent=0 // pred_check
    _
  $region31: #{pna_tower_forward.1} parent=0 // pred_check_branch
    %1312 = sbr.rel (0) target = $region33
  $region32: #{pna_tower_forward.1} parent=0 // pred_region
    _
  $region33: #{pna_tower_forward.1} parent=0 // pred_fallthru
    _

</llo_original>
